<compile_context>
chip_gen: v7x
topology: tpu7x:2x2x1
jax: 0.10.0
libtpu: 0.0.40
codegen_flags: <defaults>
</compile_context>

<pallas_src>
import functools

import jax
import jax.numpy as jnp
from jax.experimental import pallas as pl
from jax.experimental.pallas import tpu as pltpu


def _round_up(x, m):
    return ((x + m - 1) // m) * m


def _vmem_limit_bytes():
    cap = 64 * 1024 * 1024
    try:
        info = pltpu.get_tpu_info()
        cap = int(getattr(info, "vmem_capacity_bytes", cap))
    except Exception:
        pass
    # ~75% of physical, capped at 96 MiB (v5e/v6e); -> ~48 MiB on v7x.
    return int(min(cap * 3 // 4, 96 * 1024 * 1024))


def _choose_tile(n, w, g_pad, hid_pad, vmem_limit):
    """Largest row-tile whose streamed buffers fit the scoped-VMEM budget."""
    n128 = _round_up(n, 128)
    budget = vmem_limit
    budget -= 2 * n128 * w * 2          # fully-resident H (assume double-buffered bf16)
    budget -= 8 << 20                   # weights / biases / partials / headroom
    per_row = 4 * n128                  # int8 A row double-buffered + in-kernel bf16 widen
    per_row += 4 * w                    # bf16 output tile (double-buffered)
    per_row += 4 * g_pad                # bf16 P column tile (double-buffered)
    per_row += 4 * hid_pad              # f32 h3 temporary in the hop-3 kernel
    for tm in (1024, 512, 256, 128):
        if tm > n128:
            continue                    # never tile wider than the graph
        if _round_up(n, tm) > n128 + n128 // 4:
            continue                    # cap padding waste at ~25%
        if tm * per_row <= budget:
            return tm
    return 128


# ---------------------------------------------------------------------------
# Kernel: fully fused small-graph path (A resident in VMEM)
#   out = classifier(mean_pool(relu(S^3 X W1 + b1)))
#   with S = R A R folded as row scales (H already pre-scaled by R outside).
# ---------------------------------------------------------------------------
def _fused_small_kernel(a_ref, h_ref, dinv_ref, r_ref, p_ref, cinv_ref,
                        w1_ref, b1_ref, w2_ref, b2_ref, w3_ref, b3_ref,
                        out_ref, *, apply_w1):
    a = a_ref[...].astype(jnp.bfloat16)                      # exact 0/1
    h1 = (jnp.dot(a, h_ref[...], preferred_element_type=jnp.float32)
          * dinv_ref[...]).astype(jnp.bfloat16)              # r ⊙ S X   (pre-scaled)
    h2 = (jnp.dot(a, h1, preferred_element_type=jnp.float32)
          * dinv_ref[...]).astype(jnp.bfloat16)              # r ⊙ S^2 X
    h3 = jnp.dot(a, h2, preferred_element_type=jnp.float32) * r_ref[...]   # S^3 X
    if apply_w1:                                             # static: c_in <= hidden
        h3 = jnp.dot(h3.astype(jnp.bfloat16), w1_ref[...],
                     preferred_element_type=jnp.float32)
    h3 = jnp.maximum(h3 + b1_ref[...], 0.0)
    pooled = jnp.dot(p_ref[...], h3.astype(jnp.bfloat16),
                     preferred_element_type=jnp.float32) * cinv_ref[...]
    z = jnp.maximum(jnp.dot(pooled.astype(jnp.bfloat16), w2_ref[...],
                            preferred_element_type=jnp.float32) + b2_ref[...], 0.0)
    out_ref[...] = (jnp.dot(z.astype(jnp.bfloat16), w3_ref[...],
                            preferred_element_type=jnp.float32) + b3_ref[...])


# ---------------------------------------------------------------------------
# Kernel: one propagation hop (tiled path)   H_out = scale ⊙ (A @ H_in)
# ---------------------------------------------------------------------------
def _hop_kernel(a_ref, h_ref, scale_ref, o_ref):
    acc = jnp.dot(a_ref[...].astype(jnp.bfloat16), h_ref[...],
                  preferred_element_type=jnp.float32)
    o_ref[...] = (acc * scale_ref[...]).astype(jnp.bfloat16)


def _hop(a, h, scale, *, tm, vmem_limit):
    n_pad, w = h.shape
    return pl.pallas_call(
        _hop_kernel,
        out_shape=jax.ShapeDtypeStruct((n_pad, w), jnp.bfloat16),
        grid_spec=pltpu.PrefetchScalarGridSpec(
            num_scalar_prefetch=0,
            grid=(n_pad // tm,),
            in_specs=[
                pl.BlockSpec((tm, n_pad), lambda i: (i, 0)),   # int8 A row tile (streamed)
                pl.BlockSpec((n_pad, w), lambda i: (0, 0)),    # H fully resident
                pl.BlockSpec((tm, 1), lambda i: (i, 0)),       # per-row scale (f32)
            ],
            out_specs=pl.BlockSpec((tm, w), lambda i: (i, 0)),
        ),
        compiler_params=pltpu.CompilerParams(
            dimension_semantics=("parallel",),
            vmem_limit_bytes=vmem_limit,
        ),
    )(a, h, scale)


# ---------------------------------------------------------------------------
# Kernel: hop 3 + SGConv linear/ReLU + PER-TILE pooled partials (row-parallel)
# ---------------------------------------------------------------------------
def _hop3_pool_kernel(a_ref, h_ref, r_ref, p_ref, w1_ref, b1_ref, part_ref,
                      *, apply_w1):
    h3 = jnp.dot(a_ref[...].astype(jnp.bfloat16), h_ref[...],
                 preferred_element_type=jnp.float32) * r_ref[...]
    if apply_w1:
        h3 = jnp.dot(h3.astype(jnp.bfloat16), w1_ref[...],
                     preferred_element_type=jnp.float32)
    h3 = jnp.maximum(h3 + b1_ref[...], 0.0)                   # (TM, hid_pad) f32
    # Per-tile sum-pool partial (binary one-hot P column slice, exact in bf16).
    part_ref[...] = jnp.dot(p_ref[...], h3.astype(jnp.bfloat16),
                            preferred_element_type=jnp.float32)


# ---------------------------------------------------------------------------
# Kernel: combine pooled partials, apply mean and the MLP classifier
# ---------------------------------------------------------------------------
def _combine_kernel(part_ref, cinv_ref, w2_ref, b2_ref, w3_ref, b3_ref, out_ref):
    pooled = jnp.sum(part_ref[...], axis=0) * cinv_ref[...]
    z = jnp.maximum(jnp.dot(pooled.astype(jnp.bfloat16), w2_ref[...],
                            preferred_element_type=jnp.float32) + b2_ref[...], 0.0)
    out_ref[...] = (jnp.dot(z.astype(jnp.bfloat16), w3_ref[...],
                            preferred_element_type=jnp.float32) + b3_ref[...])


# ---------------------------------------------------------------------------
# Wrapper
# ---------------------------------------------------------------------------
@functools.partial(jax.jit, static_argnames=("num_graphs", "force_tiled"))
def subgcn_forward(x, edge_index, batch, params, *, num_graphs, force_tiled=False):
    w1, b1, w2, b2, w3, b3 = params
    n, c_in = x.shape
    hidden = w1.shape[1]
    h_half = w2.shape[1]
    nc = w3.shape[1]

    # ---- static padding / path decisions -----------------------------------
    c_pad = _round_up(c_in, 128)
    hid_pad = _round_up(hidden, 128)
    hh_pad = _round_up(h_half, 128)
    nc_pad = _round_up(nc, 128)
    g_pad = _round_up(num_graphs, 8)
    n128 = _round_up(n, 128)
    vmem_limit = _vmem_limit_bytes()

    apply_w1 = c_in <= hidden            # propagate at the narrower width
    w = c_pad if apply_w1 else hid_pad

    # Fast path if the int8 A (+ its in-kernel bf16 widen) and the H buffers fit VMEM.
    fast_bytes = 4 * n128 * n128 + 16 * n128 * max(w, hid_pad) + (8 << 20)
    use_fast = (not force_tiled) and (fast_bytes <= vmem_limit)

    if use_fast:
        tm = n128
        n_pad = n128
    else:
        tm = _choose_tile(n, w, g_pad, hid_pad, vmem_limit)
        n_pad = _round_up(n, tm)

    # ---- glue: binary int8 adjacency built in one scatter at padded size ----
    src, dst = edge_index[0], edge_index[1]
    diag = jnp.arange(n, dtype=jnp.int32)
    a = jnp.zeros((n_pad, n_pad), jnp.int8)
    a = a.at[dst, src].set(1)            # message flows src -> dst, duplicates collapsed
    a = a.at[diag, diag].set(1)          # add (remaining) self-loops
    deg = jnp.sum(a, axis=1, dtype=jnp.int32).astype(jnp.float32)
    r = jnp.where(deg > 0.0, jax.lax.rsqrt(deg), 0.0)[:, None]   # (n_pad,1) d^-1/2, f32
    d_inv = r * r                                                # (n_pad,1) d^-1,   f32

    # ---- glue: binary pool matrix + inverse counts --------------------------
    one_hot = (batch[None, :] == jnp.arange(num_graphs)[:, None]).astype(jnp.float32)
    counts = jnp.maximum(jnp.sum(one_hot, axis=1, keepdims=True), 1.0)
    p = jnp.pad(one_hot, ((0, g_pad - num_graphs), (0, n_pad - n))).astype(jnp.bfloat16)
    cinv = jnp.pad(1.0 / counts, ((0, g_pad - num_graphs), (0, 0)))        # (g_pad,1) f32

    # ---- glue: zero-pad parameters to lane-dense shapes ----------------------
    w1p = jnp.pad(w1, ((0, c_pad - c_in), (0, hid_pad - hidden))).astype(jnp.bfloat16)
    b1p = jnp.pad(b1, ((0, 0), (0, hid_pad - hidden)))
    w2p = jnp.pad(w2, ((0, hid_pad - hidden), (0, hh_pad - h_half))).astype(jnp.bfloat16)
    b2p = jnp.pad(b2, ((0, 0), (0, hh_pad - h_half)))
    w3p = jnp.pad(w3, ((0, hh_pad - h_half), (0, nc_pad - nc))).astype(jnp.bfloat16)
    b3p = jnp.pad(b3, ((0, 0), (0, nc_pad - nc)))

    # ---- feature matrix, pre-scaled by d^-1/2 (folds left factor of S) -------
    if apply_w1:
        h0 = jnp.pad(x.astype(jnp.float32), ((0, n_pad - n), (0, c_pad - c_in)))
    else:
        h0 = jnp.pad(jnp.dot(x.astype(jnp.float32), w1),
                     ((0, n_pad - n), (0, hid_pad - hidden)))
    h0 = (h0 * r).astype(jnp.bfloat16)

    if use_fast:
        # -------- single fused call: 3 hops + W1/ReLU + mean pool + MLP -------
        out = pl.pallas_call(
            functools.partial(_fused_small_kernel, apply_w1=apply_w1),
            out_shape=jax.ShapeDtypeStruct((g_pad, nc_pad), jnp.float32),
            grid_spec=pltpu.PrefetchScalarGridSpec(
                num_scalar_prefetch=0,
                grid=(1,),
                in_specs=[
                    pl.BlockSpec((n_pad, n_pad), lambda i: (0, 0)),   # A (int8)
                    pl.BlockSpec((n_pad, w), lambda i: (0, 0)),       # H0 (pre-scaled)
                    pl.BlockSpec((n_pad, 1), lambda i: (0, 0)),       # d^-1
                    pl.BlockSpec((n_pad, 1), lambda i: (0, 0)),       # d^-1/2
                    pl.BlockSpec((g_pad, n_pad), lambda i: (0, 0)),   # P
                    pl.BlockSpec((g_pad, 1), lambda i: (0, 0)),       # 1/counts
                    pl.BlockSpec((c_pad, hid_pad), lambda i: (0, 0)),  # W1
                    pl.BlockSpec((1, hid_pad), lambda i: (0, 0)),     # b1
                    pl.BlockSpec((hid_pad, hh_pad), lambda i: (0, 0)),  # W2
                    pl.BlockSpec((1, hh_pad), lambda i: (0, 0)),      # b2
                    pl.BlockSpec((hh_pad, nc_pad), lambda i: (0, 0)),  # W3
                    pl.BlockSpec((1, nc_pad), lambda i: (0, 0)),      # b3
                ],
                out_specs=pl.BlockSpec((g_pad, nc_pad), lambda i: (0, 0)),
            ),
            compiler_params=pltpu.CompilerParams(
                dimension_semantics=("arbitrary",),
                vmem_limit_bytes=vmem_limit,
            ),
        )(a, h0, d_inv, r, p, cinv, w1p, b1p, w2p, b2p, w3p, b3p)
        return out[:num_graphs, :nc]

    # ------------------------- tiled / streaming path -------------------------
    # hops 1 & 2: row-parallel,  H <- d^-1 ⊙ (A @ H)   (keeps H pre-scaled by d^-1/2)
    h = _hop(a, h0, d_inv, tm=tm, vmem_limit=vmem_limit)
    h = _hop(a, h, d_inv, tm=tm, vmem_limit=vmem_limit)

    # hop 3 + W1/ReLU + per-tile pooled partials (row-parallel; both TCs on v7x)
    ntiles = n_pad // tm
    partials = pl.pallas_call(
        functools.partial(_hop3_pool_kernel, apply_w1=apply_w1),
        out_shape=jax.ShapeDtypeStruct((ntiles, g_pad, hid_pad), jnp.float32),
        grid_spec=pltpu.PrefetchScalarGridSpec(
            num_scalar_prefetch=0,
            grid=(ntiles,),
            in_specs=[
                pl.BlockSpec((tm, n_pad), lambda i: (i, 0)),       # int8 A row tile
                pl.BlockSpec((n_pad, w), lambda i: (0, 0)),        # H resident
                pl.BlockSpec((tm, 1), lambda i: (i, 0)),           # d^-1/2 row slice
                pl.BlockSpec((g_pad, tm), lambda i: (0, i)),       # P column tile
                pl.BlockSpec((c_pad, hid_pad), lambda i: (0, 0)),  # W1
                pl.BlockSpec((1, hid_pad), lambda i: (0, 0)),      # b1
            ],
            out_specs=pl.BlockSpec((None, g_pad, hid_pad), lambda i: (i, 0, 0)),
        ),
        compiler_params=pltpu.CompilerParams(
            dimension_semantics=("parallel",),
            vmem_limit_bytes=vmem_limit,
        ),
    )(a, h, r, p, w1p, b1p)

    # combine partials + mean + classifier (tiny)
    out = pl.pallas_call(
        _combine_kernel,
        out_shape=jax.ShapeDtypeStruct((g_pad, nc_pad), jnp.float32),
        grid_spec=pltpu.PrefetchScalarGridSpec(
            num_scalar_prefetch=0,
            grid=(1,),
            in_specs=[
                pl.BlockSpec((ntiles, g_pad, hid_pad), lambda i: (0, 0, 0)),
                pl.BlockSpec((g_pad, 1), lambda i: (0, 0)),
                pl.BlockSpec((hid_pad, hh_pad), lambda i: (0, 0)),
                pl.BlockSpec((1, hh_pad), lambda i: (0, 0)),
                pl.BlockSpec((hh_pad, nc_pad), lambda i: (0, 0)),
                pl.BlockSpec((1, nc_pad), lambda i: (0, 0)),
            ],
            out_specs=pl.BlockSpec((g_pad, nc_pad), lambda i: (0, 0)),
        ),
        compiler_params=pltpu.CompilerParams(
            dimension_semantics=("arbitrary",),
            vmem_limit_bytes=vmem_limit,
        ),
    )(partials, cinv, w2p, b2p, w3p, b3p)

    return out[:num_graphs, :nc]


def init_params(key, c_in, hidden_size, nc):
    ks = jax.random.split(key, 6)
    scale = 0.1
    w1 = scale * jax.random.normal(ks[0], (c_in, hidden_size), jnp.float32)
    b1 = scale * jax.random.normal(ks[1], (1, hidden_size), jnp.float32)
    w2 = scale * jax.random.normal(ks[2], (hidden_size, hidden_size // 2), jnp.float32)
    b2 = scale * jax.random.normal(ks[3], (1, hidden_size // 2), jnp.float32)
    w3 = scale * jax.random.normal(ks[4], (hidden_size // 2, nc), jnp.float32)
    b3 = scale * jax.random.normal(ks[5], (1, nc), jnp.float32)
    return (w1, b1, w2, b2, w3, b3)


def _reference(x, edge_index, batch, params, num_graphs):
    """Pure-JAX f32 reference of the same forward pass."""
    w1, b1, w2, b2, w3, b3 = params
    n = x.shape[0]
    src, dst = edge_index[0], edge_index[1]
    diag = jnp.arange(n)
    a = jnp.zeros((n, n), jnp.float32).at[dst, src].set(1.0)
    a = a.at[diag, diag].set(1.0)
    deg = jnp.sum(a, axis=1)
    dis = jnp.where(deg > 0, jax.lax.rsqrt(deg), 0.0)
    s = dis[:, None] * a * dis[None, :]
    h = s @ (s @ (s @ x))
    h = jnp.maximum(h @ w1 + b1, 0.0)
    one_hot = (batch[None, :] == jnp.arange(num_graphs)[:, None]).astype(jnp.float32)
    h_avg = (one_hot @ h) / jnp.maximum(one_hot.sum(1, keepdims=True), 1.0)
    z = jnp.maximum(h_avg @ w2 + b2, 0.0)
    return z @ w3 + b3


if __name__ == "__main__":
    key = jax.random.PRNGKey(0)
    k_x, k_e, k_p = jax.random.split(key, 3)

    # ---- test 1: tiny graph -> fully VMEM-resident fused fast path ----------
    N_NODES, C_IN, HIDDEN, NC, N_GRAPHS, N_EDGES = 16, 4, 32, 8, 2, 40
    x = jax.random.normal(k_x, (N_NODES, C_IN), jnp.float32)
    edge_index = jax.random.randint(k_e, (2, N_EDGES), 0, N_NODES, jnp.int32)
    batch = jnp.concatenate([jnp.zeros(8, jnp.int32), jnp.ones(8, jnp.int32)])
    params = init_params(k_p, C_IN, HIDDEN, NC)

    logits = subgcn_forward(x, edge_index, batch, params, num_graphs=N_GRAPHS)
    jax.block_until_ready(logits)
    assert logits.shape == (N_GRAPHS, NC)
    ref = _reference(x, edge_index, batch, params, N_GRAPHS)
    assert jnp.allclose(logits, ref, rtol=2e-2, atol=2e-2), (
        f"fast path max abs diff {float(jnp.max(jnp.abs(logits - ref)))}")

    # ---- test 2: medium graph forced through the tiled/streaming path -------
    k_x2, k_e2 = jax.random.split(k_e, 2)
    N2, E2 = 640, 2560
    x2 = jax.random.normal(k_x2, (N2, C_IN), jnp.float32)
    edge_index2 = jax.random.randint(k_e2, (2, E2), 0, N2, jnp.int32)
    batch2 = jnp.concatenate([jnp.zeros(N2 // 2, jnp.int32),
                              jnp.ones(N2 - N2 // 2, jnp.int32)])

    logits2 = subgcn_forward(x2, edge_index2, batch2, params,
                             num_graphs=N_GRAPHS, force_tiled=True)
    jax.block_until_ready(logits2)
    assert logits2.shape == (N_GRAPHS, NC)
    ref2 = _reference(x2, edge_index2, batch2, params, N_GRAPHS)
    assert jnp.allclose(logits2, ref2, rtol=2e-2, atol=2e-2), (
        f"tiled path max abs diff {float(jnp.max(jnp.abs(logits2 - ref2)))}")

    print("KERNEL_OK")
</pallas_src>

<mosaic_0001>
module attributes {stable_mosaic.version = 11 : i64} {
  func.func @_fused_small_kernel(%arg0: i32, %arg1: memref<128x128xi8, #tpu.memory_space<vmem>>, %arg2: memref<128x128xbf16, #tpu.memory_space<vmem>>, %arg3: memref<128x1xf32, #tpu.memory_space<vmem>>, %arg4: memref<128x1xf32, #tpu.memory_space<vmem>>, %arg5: memref<8x128xbf16, #tpu.memory_space<vmem>>, %arg6: memref<8x1xf32, #tpu.memory_space<vmem>>, %arg7: memref<128x128xbf16, #tpu.memory_space<vmem>>, %arg8: memref<1x128xf32, #tpu.memory_space<vmem>>, %arg9: memref<128x128xbf16, #tpu.memory_space<vmem>>, %arg10: memref<1x128xf32, #tpu.memory_space<vmem>>, %arg11: memref<128x128xbf16, #tpu.memory_space<vmem>>, %arg12: memref<1x128xf32, #tpu.memory_space<vmem>>, %arg13: memref<8x128xf32, #tpu.memory_space<vmem>>) attributes {dimension_semantics = [#tpu.dimension_semantics<arbitrary>], iteration_bounds = array<i64: 1>, scalar_prefetch = 0 : i64, scratch_operands = 0 : i64, tpu.core_type = #tpu.core_type<tc>, window_params = [{pipeline_mode = #tpu.pipeline_mode<synchronous>, transform_indices = @transform_0, window_bounds = array<i64: 128, 128>}, {pipeline_mode = #tpu.pipeline_mode<synchronous>, transform_indices = @transform_1, window_bounds = array<i64: 128, 128>}, {pipeline_mode = #tpu.pipeline_mode<synchronous>, transform_indices = @transform_2, window_bounds = array<i64: 128, 1>}, {pipeline_mode = #tpu.pipeline_mode<synchronous>, transform_indices = @transform_3, window_bounds = array<i64: 128, 1>}, {pipeline_mode = #tpu.pipeline_mode<synchronous>, transform_indices = @transform_4, window_bounds = array<i64: 8, 128>}, {pipeline_mode = #tpu.pipeline_mode<synchronous>, transform_indices = @transform_5, window_bounds = array<i64: 8, 1>}, {pipeline_mode = #tpu.pipeline_mode<synchronous>, transform_indices = @transform_6, window_bounds = array<i64: 128, 128>}, {pipeline_mode = #tpu.pipeline_mode<synchronous>, transform_indices = @transform_7, window_bounds = array<i64: 1, 128>}, {pipeline_mode = #tpu.pipeline_mode<synchronous>, transform_indices = @transform_8, window_bounds = array<i64: 128, 128>}, {pipeline_mode = #tpu.pipeline_mode<synchronous>, transform_indices = @transform_9, window_bounds = array<i64: 1, 128>}, {pipeline_mode = #tpu.pipeline_mode<synchronous>, transform_indices = @transform_10, window_bounds = array<i64: 128, 128>}, {pipeline_mode = #tpu.pipeline_mode<synchronous>, transform_indices = @transform_11, window_bounds = array<i64: 1, 128>}, {pipeline_mode = #tpu.pipeline_mode<synchronous>, transform_indices = @transform_12, window_bounds = array<i64: 8, 128>}]} {
    %c0 = arith.constant 0 : index
    %c0_0 = arith.constant 0 : index
    %0 = vector.load %arg1[%c0, %c0_0] : memref<128x128xi8, #tpu.memory_space<vmem>>, vector<128x128xi8>
    %1 = arith.sitofp %0 : vector<128x128xi8> to vector<128x128xbf16>
    %c0_1 = arith.constant 0 : index
    %c0_2 = arith.constant 0 : index
    %2 = vector.load %arg2[%c0_1, %c0_2] : memref<128x128xbf16, #tpu.memory_space<vmem>>, vector<128x128xbf16>
    %cst = arith.constant dense<0.000000e+00> : vector<128x128xf32>
    %3 = tpu.matmul %1, %2, %cst {dimension_numbers = #tpu.dot_dimension_numbers<[1], [0], [0], [1], [0, 0, 1, 1], [], []>} : vector<128x128xbf16>, vector<128x128xbf16>, vector<128x128xf32> -> vector<128x128xf32>
    %c0_3 = arith.constant 0 : index
    %c0_4 = arith.constant 0 : index
    %4 = vector.load %arg3[%c0_3, %c0_4] : memref<128x1xf32, #tpu.memory_space<vmem>>, vector<128x1xf32>
    %5 = vector.broadcast %4 : vector<128x1xf32> to vector<128x128xf32>
    %6 = arith.mulf %3, %5 : vector<128x128xf32>
    %7 = arith.truncf %6 : vector<128x128xf32> to vector<128x128xbf16>
    %cst_5 = arith.constant dense<0.000000e+00> : vector<128x128xf32>
    %8 = tpu.matmul %1, %7, %cst_5 {dimension_numbers = #tpu.dot_dimension_numbers<[1], [0], [0], [1], [0, 0, 1, 1], [], []>} : vector<128x128xbf16>, vector<128x128xbf16>, vector<128x128xf32> -> vector<128x128xf32>
    %c0_6 = arith.constant 0 : index
    %c0_7 = arith.constant 0 : index
    %9 = vector.load %arg3[%c0_6, %c0_7] : memref<128x1xf32, #tpu.memory_space<vmem>>, vector<128x1xf32>
    %10 = vector.broadcast %9 : vector<128x1xf32> to vector<128x128xf32>
    %11 = arith.mulf %8, %10 : vector<128x128xf32>
    %12 = arith.truncf %11 : vector<128x128xf32> to vector<128x128xbf16>
    %cst_8 = arith.constant dense<0.000000e+00> : vector<128x128xf32>
    %13 = tpu.matmul %1, %12, %cst_8 {dimension_numbers = #tpu.dot_dimension_numbers<[1], [0], [0], [1], [0, 0, 1, 1], [], []>} : vector<128x128xbf16>, vector<128x128xbf16>, vector<128x128xf32> -> vector<128x128xf32>
    %c0_9 = arith.constant 0 : index
    %c0_10 = arith.constant 0 : index
    %14 = vector.load %arg4[%c0_9, %c0_10] : memref<128x1xf32, #tpu.memory_space<vmem>>, vector<128x1xf32>
    %15 = vector.broadcast %14 : vector<128x1xf32> to vector<128x128xf32>
    %16 = arith.mulf %13, %15 : vector<128x128xf32>
    %17 = arith.truncf %16 : vector<128x128xf32> to vector<128x128xbf16>
    %c0_11 = arith.constant 0 : index
    %c0_12 = arith.constant 0 : index
    %18 = vector.load %arg7[%c0_11, %c0_12] : memref<128x128xbf16, #tpu.memory_space<vmem>>, vector<128x128xbf16>
    %cst_13 = arith.constant dense<0.000000e+00> : vector<128x128xf32>
    %19 = tpu.matmul %17, %18, %cst_13 {dimension_numbers = #tpu.dot_dimension_numbers<[1], [0], [0], [1], [0, 0, 1, 1], [], []>} : vector<128x128xbf16>, vector<128x128xbf16>, vector<128x128xf32> -> vector<128x128xf32>
    %c0_14 = arith.constant 0 : index
    %c0_15 = arith.constant 0 : index
    %20 = vector.load %arg8[%c0_14, %c0_15] : memref<1x128xf32, #tpu.memory_space<vmem>>, vector<1x128xf32>
    %21 = vector.broadcast %20 : vector<1x128xf32> to vector<128x128xf32>
    %22 = arith.addf %19, %21 : vector<128x128xf32>
    %cst_16 = arith.constant 0.000000e+00 : f32
    %23 = vector.broadcast %cst_16 : f32 to vector<128x128xf32>
    %24 = arith.maximumf %22, %23 : vector<128x128xf32>
    %c0_17 = arith.constant 0 : index
    %c0_18 = arith.constant 0 : index
    %25 = vector.load %arg5[%c0_17, %c0_18] : memref<8x128xbf16, #tpu.memory_space<vmem>>, vector<8x128xbf16>
    %26 = arith.truncf %24 : vector<128x128xf32> to vector<128x128xbf16>
    %cst_19 = arith.constant dense<0.000000e+00> : vector<8x128xf32>
    %27 = tpu.matmul %25, %26, %cst_19 {dimension_numbers = #tpu.dot_dimension_numbers<[1], [0], [0], [1], [0, 0, 1, 1], [], []>} : vector<8x128xbf16>, vector<128x128xbf16>, vector<8x128xf32> -> vector<8x128xf32>
    %c0_20 = arith.constant 0 : index
    %c0_21 = arith.constant 0 : index
    %28 = vector.load %arg6[%c0_20, %c0_21] : memref<8x1xf32, #tpu.memory_space<vmem>>, vector<8x1xf32>
    %29 = vector.broadcast %28 : vector<8x1xf32> to vector<8x128xf32>
    %30 = arith.mulf %27, %29 : vector<8x128xf32>
    %31 = arith.truncf %30 : vector<8x128xf32> to vector<8x128xbf16>
    %c0_22 = arith.constant 0 : index
    %c0_23 = arith.constant 0 : index
    %32 = vector.load %arg9[%c0_22, %c0_23] : memref<128x128xbf16, #tpu.memory_space<vmem>>, vector<128x128xbf16>
    %cst_24 = arith.constant dense<0.000000e+00> : vector<8x128xf32>
    %33 = tpu.matmul %31, %32, %cst_24 {dimension_numbers = #tpu.dot_dimension_numbers<[1], [0], [0], [1], [0, 0, 1, 1], [], []>} : vector<8x128xbf16>, vector<128x128xbf16>, vector<8x128xf32> -> vector<8x128xf32>
    %c0_25 = arith.constant 0 : index
    %c0_26 = arith.constant 0 : index
    %34 = vector.load %arg10[%c0_25, %c0_26] : memref<1x128xf32, #tpu.memory_space<vmem>>, vector<1x128xf32>
    %35 = vector.broadcast %34 : vector<1x128xf32> to vector<8x128xf32>
    %36 = arith.addf %33, %35 : vector<8x128xf32>
    %cst_27 = arith.constant 0.000000e+00 : f32
    %37 = vector.broadcast %cst_27 : f32 to vector<8x128xf32>
    %38 = arith.maximumf %36, %37 : vector<8x128xf32>
    %39 = arith.truncf %38 : vector<8x128xf32> to vector<8x128xbf16>
    %c0_28 = arith.constant 0 : index
    %c0_29 = arith.constant 0 : index
    %40 = vector.load %arg11[%c0_28, %c0_29] : memref<128x128xbf16, #tpu.memory_space<vmem>>, vector<128x128xbf16>
    %cst_30 = arith.constant dense<0.000000e+00> : vector<8x128xf32>
    %41 = tpu.matmul %39, %40, %cst_30 {dimension_numbers = #tpu.dot_dimension_numbers<[1], [0], [0], [1], [0, 0, 1, 1], [], []>} : vector<8x128xbf16>, vector<128x128xbf16>, vector<8x128xf32> -> vector<8x128xf32>
    %c0_31 = arith.constant 0 : index
    %c0_32 = arith.constant 0 : index
    %42 = vector.load %arg12[%c0_31, %c0_32] : memref<1x128xf32, #tpu.memory_space<vmem>>, vector<1x128xf32>
    %43 = vector.broadcast %42 : vector<1x128xf32> to vector<8x128xf32>
    %44 = arith.addf %41, %43 : vector<8x128xf32>
    %c0_33 = arith.constant 0 : index
    %c0_34 = arith.constant 0 : index
    %45 = vector.load %arg13[%c0_33, %c0_34] : memref<8x128xf32, #tpu.memory_space<vmem>>, vector<8x128xf32>
    tpu.vector_store %arg13[%c0_33, %c0_34], %44 {strides = array<i32>} : memref<8x128xf32, #tpu.memory_space<vmem>>, vector<8x128xf32>,
    return
  }
  func.func @transform_0(%arg0: i32) -> (i32, i32) {
    %c0_i32 = arith.constant 0 : i32
    %c0_i32_0 = arith.constant 0 : i32
    %c0_i32_1 = arith.constant 0 : i32
    return %c0_i32, %c0_i32_0 : i32, i32
  }
  func.func @transform_1(%arg0: i32) -> (i32, i32) {
    %c0_i32 = arith.constant 0 : i32
    %c0_i32_0 = arith.constant 0 : i32
    %c0_i32_1 = arith.constant 0 : i32
    return %c0_i32, %c0_i32_0 : i32, i32
  }
  func.func @transform_2(%arg0: i32) -> (i32, i32) {
    %c0_i32 = arith.constant 0 : i32
    %c0_i32_0 = arith.constant 0 : i32
    %c0_i32_1 = arith.constant 0 : i32
    return %c0_i32, %c0_i32_0 : i32, i32
  }
  func.func @transform_3(%arg0: i32) -> (i32, i32) {
    %c0_i32 = arith.constant 0 : i32
    %c0_i32_0 = arith.constant 0 : i32
    %c0_i32_1 = arith.constant 0 : i32
    return %c0_i32, %c0_i32_0 : i32, i32
  }
  func.func @transform_4(%arg0: i32) -> (i32, i32) {
    %c0_i32 = arith.constant 0 : i32
    %c0_i32_0 = arith.constant 0 : i32
    %c0_i32_1 = arith.constant 0 : i32
    return %c0_i32, %c0_i32_0 : i32, i32
  }
  func.func @transform_5(%arg0: i32) -> (i32, i32) {
    %c0_i32 = arith.constant 0 : i32
    %c0_i32_0 = arith.constant 0 : i32
    %c0_i32_1 = arith.constant 0 : i32
    return %c0_i32, %c0_i32_0 : i32, i32
  }
  func.func @transform_6(%arg0: i32) -> (i32, i32) {
    %c0_i32 = arith.constant 0 : i32
    %c0_i32_0 = arith.constant 0 : i32
    %c0_i32_1 = arith.constant 0 : i32
    return %c0_i32, %c0_i32_0 : i32, i32
  }
  func.func @transform_7(%arg0: i32) -> (i32, i32) {
    %c0_i32 = arith.constant 0 : i32
    %c0_i32_0 = arith.constant 0 : i32
    %c0_i32_1 = arith.constant 0 : i32
    return %c0_i32, %c0_i32_0 : i32, i32
  }
  func.func @transform_8(%arg0: i32) -> (i32, i32) {
    %c0_i32 = arith.constant 0 : i32
    %c0_i32_0 = arith.constant 0 : i32
    %c0_i32_1 = arith.constant 0 : i32
    return %c0_i32, %c0_i32_0 : i32, i32
  }
  func.func @transform_9(%arg0: i32) -> (i32, i32) {
    %c0_i32 = arith.constant 0 : i32
    %c0_i32_0 = arith.constant 0 : i32
    %c0_i32_1 = arith.constant 0 : i32
    return %c0_i32, %c0_i32_0 : i32, i32
  }
  func.func @transform_10(%arg0: i32) -> (i32, i32) {
    %c0_i32 = arith.constant 0 : i32
    %c0_i32_0 = arith.constant 0 : i32
    %c0_i32_1 = arith.constant 0 : i32
    return %c0_i32, %c0_i32_0 : i32, i32
  }
  func.func @transform_11(%arg0: i32) -> (i32, i32) {
    %c0_i32 = arith.constant 0 : i32
    %c0_i32_0 = arith.constant 0 : i32
    %c0_i32_1 = arith.constant 0 : i32
    return %c0_i32, %c0_i32_0 : i32, i32
  }
  func.func @transform_12(%arg0: i32) -> (i32, i32) {
    %c0_i32 = arith.constant 0 : i32
    %c0_i32_0 = arith.constant 0 : i32
    %c0_i32_1 = arith.constant 0 : i32
    return %c0_i32, %c0_i32_0 : i32, i32
  }
}

</mosaic_0001>

<llo_original>
// kernel: subgcn_forward.1
$region0: #{subgcn_forward.1}
  #allocation0 [shape = 'u32[]', space=smem, size = 0x4, offset = 0x4, fixed_abs, tag = 'smem constant byte address 0x4 - core index']
  #allocation1 [shape = 'u32[144,128]{1,0:T(1,128)}', space=vmem, size = 0x12000, scoped, tag = 'internal scratch']
  %s0 = inlined_call_operand.vmem [shape: s8[128,128], index: 0, kind: input, shape index: {}]
  %s1 = inlined_call_operand.vmem [shape: bf16[128,128], index: 1, kind: input, shape index: {}]
  %s2 = inlined_call_operand.vmem [shape: f32[128,1], index: 2, kind: input, shape index: {}]
  %s3 = inlined_call_operand.vmem [shape: f32[128,1], index: 3, kind: input, shape index: {}]
  %s4 = inlined_call_operand.vmem [shape: bf16[8,128], index: 4, kind: input, shape index: {}]
  %s5 = inlined_call_operand.vmem [shape: f32[8,1], index: 5, kind: input, shape index: {}]
  %s6 = inlined_call_operand.vmem [shape: bf16[128,128], index: 6, kind: input, shape index: {}]
  %s7 = inlined_call_operand.vmem [shape: f32[1,128], index: 7, kind: input, shape index: {}]
  %s8 = inlined_call_operand.vmem [shape: bf16[128,128], index: 8, kind: input, shape index: {}]
  %s9 = inlined_call_operand.vmem [shape: f32[1,128], index: 9, kind: input, shape index: {}]
  %s10 = inlined_call_operand.vmem [shape: bf16[128,128], index: 10, kind: input, shape index: {}]
  %s11 = inlined_call_operand.vmem [shape: f32[1,128], index: 11, kind: input, shape index: {}]
  %s12 = inlined_call_operand.vmem [shape: f32[8,128], index: 12, kind: output, shape index: {}]
  %s13 = sld [smem:[#allocation0]]
  $region58: #{subgcn_forward.1} parent=0
    _
  %s15 = ssub.s32 1, %s13
  %s16 = scalar_select 0, %s15, %s13
  // Predicated region
  $region2: #{subgcn_forward.1} parent=0 // pred_check
    _
  $region3: #{subgcn_forward.1} parent=0 // pred_check_branch
    %18 = sbr.rel (0) target = $region5
  $region4: #{subgcn_forward.1} parent=0 // pred_region
    _
  $region5: #{subgcn_forward.1} parent=0 // pred_fallthru
    _
  // Predicated region
  $region6: #{subgcn_forward.1} parent=0 // pred_check
    _
  $region7: #{subgcn_forward.1} parent=0 // pred_check_branch
    %20 = sbr.rel (0) target = $region9
  $region8: #{subgcn_forward.1} parent=0 // pred_region
    _
  $region9: #{subgcn_forward.1} parent=0 // pred_fallthru
    _
  // Predicated region
  $region10: #{subgcn_forward.1} parent=0 // pred_check
    _
  $region11: #{subgcn_forward.1} parent=0 // pred_check_branch
    %22 = sbr.rel (0) target = $region13
  $region12: #{subgcn_forward.1} parent=0 // pred_region
    _
  $region13: #{subgcn_forward.1} parent=0 // pred_fallthru
    _
  // Predicated region
  $region14: #{subgcn_forward.1} parent=0 // pred_check
    _
  $region15: #{subgcn_forward.1} parent=0 // pred_check_branch
    %24 = sbr.rel (0) target = $region17
  $region16: #{subgcn_forward.1} parent=0 // pred_region
    _
  $region17: #{subgcn_forward.1} parent=0 // pred_fallthru
    _
  // Predicated region
  $region18: #{subgcn_forward.1} parent=0 // pred_check
    _
  $region19: #{subgcn_forward.1} parent=0 // pred_check_branch
    %26 = sbr.rel (0) target = $region21
  $region20: #{subgcn_forward.1} parent=0 // pred_region
    _
  $region21: #{subgcn_forward.1} parent=0 // pred_fallthru
    _
  // Predicated region
  $region22: #{subgcn_forward.1} parent=0 // pred_check
    _
  $region23: #{subgcn_forward.1} parent=0 // pred_check_branch
    %28 = sbr.rel (0) target = $region25
  $region24: #{subgcn_forward.1} parent=0 // pred_region
    _
  $region25: #{subgcn_forward.1} parent=0 // pred_fallthru
    _
  // Predicated region
  $region26: #{subgcn_forward.1} parent=0 // pred_check
    _
  $region27: #{subgcn_forward.1} parent=0 // pred_check_branch
    %30 = sbr.rel (0) target = $region29
  $region28: #{subgcn_forward.1} parent=0 // pred_region
    _
  $region29: #{subgcn_forward.1} parent=0 // pred_fallthru
    _
  // Predicated region
  $region30: #{subgcn_forward.1} parent=0 // pred_check
    _
  $region31: #{subgcn_forward.1} parent=0 // pred_check_branch
    %32 = sbr.rel (0) target = $region33
  $region32: #{subgcn_forward.1} parent=0 // pred_region
    _
  $region33: #{subgcn_forward.1} parent=0 // pred_fallthru
    _
  // Predicated region
  $region34: #{subgcn_forward.1} parent=0 // pred_check
    _
  $region35: #{subgcn_forward.1} parent=0 // pred_check_branch
    %34 = sbr.rel (0) target = $region37
  $region36: #{subgcn_forward.1} parent=0 // pred_region
    _
  $region37: #{subgcn_forward.1} parent=0 // pred_fallthru
    _
  // Predicated region
  $region38: #{subgcn_forward.1} parent=0 // pred_check
    _
  $region39: #{subgcn_forward.1} parent=0 // pred_check_branch
    %36 = sbr.rel (0) target = $region41
  $region40: #{subgcn_forward.1} parent=0 // pred_region
    _
  $region41: #{subgcn_forward.1} parent=0 // pred_fallthru
    _
  // Predicated region
  $region42: #{subgcn_forward.1} parent=0 // pred_check
    _
  $region43: #{subgcn_forward.1} parent=0 // pred_check_branch
    %38 = sbr.rel (0) target = $region45
  $region44: #{subgcn_forward.1} parent=0 // pred_region
    _
  $region45: #{subgcn_forward.1} parent=0 // pred_fallthru
    _
  // Predicated region
  $region46: #{subgcn_forward.1} parent=0 // pred_check
    _
  $region47: #{subgcn_forward.1} parent=0 // pred_check_branch
    %40 = sbr.rel (0) target = $region49
  $region48: #{subgcn_forward.1} parent=0 // pred_region
    _
  $region49: #{subgcn_forward.1} parent=0 // pred_fallthru
    _
  %v42 = vld [vmem:[%s0] sm:$0x3]
  %v43 = vld [vmem:[%s0 + $0x2] sm:$0x3]
  %v44 = vld [vmem:[%s0 + $0x4] sm:$0x3]
  %v45 = vld [vmem:[%s0 + $0x6] sm:$0x3]
  %v46 = vld [vmem:[%s0 + $0x8] sm:$0x3]
  %v47 = vld [vmem:[%s0 + $0xa] sm:$0x3]
  %v48 = vld [vmem:[%s0 + $0xc] sm:$0x3]
  %v49 = vld [vmem:[%s0 + $0xe] sm:$0x3]
  %v50 = vld [vmem:[%s0 + $0x10] sm:$0x3]
  %v51 = vld [vmem:[%s0 + $0x12] sm:$0x3]
  %v52 = vld [vmem:[%s0 + $0x14] sm:$0x3]
  %v53 = vld [vmem:[%s0 + $0x16] sm:$0x3]
  %v54 = vld [vmem:[%s0 + $0x18] sm:$0x3]
  %v55 = vld [vmem:[%s0 + $0x1a] sm:$0x3]
  %v56 = vld [vmem:[%s0 + $0x1c] sm:$0x3]
  %v57 = vld [vmem:[%s0 + $0x1e] sm:$0x3]
  %v58 = vunpack.c.l.s8.bf16 %v42
  %v59 = vunpack.c.l.s8.bf16 %v43
  %v60 = vunpack.c.l.s8.bf16 %v44
  %v61 = vunpack.c.l.s8.bf16 %v45
  %v62 = vunpack.c.l.s8.bf16 %v46
  %v63 = vunpack.c.l.s8.bf16 %v47
  %v64 = vunpack.c.l.s8.bf16 %v48
  %v65 = vunpack.c.l.s8.bf16 %v49
  %v66 = vunpack.c.l.s8.bf16 %v50
  %v67 = vunpack.c.l.s8.bf16 %v51
  %v68 = vunpack.c.l.s8.bf16 %v52
  %v69 = vunpack.c.l.s8.bf16 %v53
  %v70 = vunpack.c.l.s8.bf16 %v54
  %v71 = vunpack.c.l.s8.bf16 %v55
  %v72 = vunpack.c.l.s8.bf16 %v56
  %v73 = vunpack.c.l.s8.bf16 %v57
  %v74 = vld [vmem:[%s1] sm:$0xf]
  %v75 = vld [vmem:[%s1 + $0x4] sm:$0xf]
  %v76 = vld [vmem:[%s1 + $0x8] sm:$0xf]
  %v77 = vld [vmem:[%s1 + $0xc] sm:$0xf]
  %v78 = vld [vmem:[%s1 + $0x10] sm:$0xf]
  %v79 = vld [vmem:[%s1 + $0x14] sm:$0xf]
  %v80 = vld [vmem:[%s1 + $0x18] sm:$0xf]
  %v81 = vld [vmem:[%s1 + $0x1c] sm:$0xf]
  %v82 = vld [vmem:[%s1 + $0x20] sm:$0xf]
  %v83 = vld [vmem:[%s1 + $0x24] sm:$0xf]
  %v84 = vld [vmem:[%s1 + $0x28] sm:$0xf]
  %v85 = vld [vmem:[%s1 + $0x2c] sm:$0xf]
  %v86 = vld [vmem:[%s1 + $0x30] sm:$0xf]
  %v87 = vld [vmem:[%s1 + $0x34] sm:$0xf]
  %v88 = vld [vmem:[%s1 + $0x38] sm:$0xf]
  %v89 = vld [vmem:[%s1 + $0x3c] sm:$0xf]
  %v106 = vunpack.c.l.b16 %v58
  %v107 = vunpack.c.l.b16 %v59
  %v108 = vunpack.c.l.b16 %v60
  %v109 = vunpack.c.l.b16 %v61
  %v110 = vunpack.c.l.b16 %v62
  %v111 = vunpack.c.l.b16 %v63
  %v112 = vunpack.c.l.b16 %v64
  %v113 = vunpack.c.l.b16 %v65
  %v114 = vunpack.c.l.b16 %v66
  %v115 = vunpack.c.l.b16 %v67
  %v116 = vunpack.c.l.b16 %v68
  %v117 = vunpack.c.l.b16 %v69
  %v118 = vunpack.c.l.b16 %v70
  %v119 = vunpack.c.l.b16 %v71
  %v120 = vunpack.c.l.b16 %v72
  %v121 = vunpack.c.l.b16 %v73
  %v122 = vpack.c.b16 %v107, %v106
  %v123 = vpack.c.b16 %v109, %v108
  %v124 = vpack.c.b16 %v111, %v110
  %v125 = vpack.c.b16 %v113, %v112
  %v126 = vpack.c.b16 %v115, %v114
  %v127 = vpack.c.b16 %v117, %v116
  %v128 = vpack.c.b16 %v119, %v118
  %v129 = vpack.c.b16 %v121, %v120
  %v154 = vunpack.c.l.b16 %v74
  %v155 = vunpack.c.l.b16 %v75
  %v156 = vunpack.c.l.b16 %v76
  %v157 = vunpack.c.l.b16 %v77
  %v158 = vunpack.c.l.b16 %v78
  %v159 = vunpack.c.l.b16 %v79
  %v160 = vunpack.c.l.b16 %v80
  %v161 = vunpack.c.l.b16 %v81
  %v162 = vunpack.c.l.b16 %v82
  %v163 = vunpack.c.l.b16 %v83
  %v164 = vunpack.c.l.b16 %v84
  %v165 = vunpack.c.l.b16 %v85
  %v166 = vunpack.c.l.b16 %v86
  %v167 = vunpack.c.l.b16 %v87
  %v168 = vunpack.c.l.b16 %v88
  %v169 = vunpack.c.l.b16 %v89
  %v170 = vpack.c.b16 %v155, %v154
  %v171 = vpack.c.b16 %v157, %v156
  %v172 = vpack.c.b16 %v159, %v158
  %v173 = vpack.c.b16 %v161, %v160
  %v174 = vpack.c.b16 %v163, %v162
  %v175 = vpack.c.b16 %v165, %v164
  %v176 = vpack.c.b16 %v167, %v166
  %v177 = vpack.c.b16 %v169, %v168
  %186 = vmatprep.subr.bf16.mxu0 0
  %187 = vmatpush1.bf16.msra.mxu0 %v170
  %188 = vmatprep.subr.bf16.mxu0 0
  %189 = vmatpush1.bf16.msra.mxu0 %v171
  %190 = vmatprep.subr.bf16.mxu0 0
  %191 = vmatpush1.bf16.msra.mxu0 %v172
  %192 = vmatprep.subr.bf16.mxu0 0
  %193 = vmatpush1.bf16.msra.mxu0 %v173
  %194 = vmatprep.subr.bf16.mxu0 0
  %195 = vmatpush1.bf16.msra.mxu0 %v174
  %196 = vmatprep.subr.bf16.mxu0 0
  %197 = vmatpush1.bf16.msra.mxu0 %v175
  %198 = vmatprep.subr.bf16.mxu0 0
  %199 = vmatpush1.bf16.msra.mxu0 %v176
  %200 = vmatprep.subr.bf16.mxu0 0
  %201 = vmatpush1.bf16.msra.mxu0 %v177
  %202 = vmatprep.subr.bf16.mxu0 0
  %203 = vmatpush1.bf16.msra.mxu0 0
  %204 = vmatprep.subr.bf16.mxu0 0
  %205 = vmatpush1.bf16.msra.mxu0 0
  %206 = vmatprep.subr.bf16.mxu0 0
  %207 = vmatpush1.bf16.msra.mxu0 0
  %208 = vmatprep.subr.bf16.mxu0 0
  %209 = vmatpush1.bf16.msra.mxu0 0
  %210 = vmatprep.subr.bf16.mxu0 0
  %211 = vmatpush1.bf16.msra.mxu0 0
  %212 = vmatprep.subr.bf16.mxu0 0
  %213 = vmatpush1.bf16.msra.mxu0 0
  %214 = vmatprep.subr.bf16.mxu0 0
  %215 = vmatpush1.bf16.msra.mxu0 0
  %216 = vmatprep.subr.bf16.mxu0 0
  %217 = vmatpush1.bf16.msra.mxu0 0
  %218 = vmatprep.mubr.bf16.mxu0 0
  %219 = vmatmul.mubr.bf16.gmra.mrb[0].mxu0 %v122
  %v220 = vpop.f32.mrb[0].mxu0
  %v221 = vadd.f32 0.0, %v220
  %v222 = vpop.f32.mrb[0].mxu0
  %v223 = vpop.f32.mrb[0].mxu0
  %v224 = vadd.f32 0.0, %v223
  %v225 = vpop.f32.mrb[0].mxu0
  %226 = vmatprep.mubr.bf16.mxu0 0
  %227 = vmatmul.mubr.bf16.gmra.mrb[0].mxu0 %v123
  %v228 = vpop.f32.mrb[0].mxu0
  %v229 = vadd.f32 0.0, %v228
  %v230 = vpop.f32.mrb[0].mxu0
  %v231 = vpop.f32.mrb[0].mxu0
  %v232 = vadd.f32 0.0, %v231
  %v233 = vpop.f32.mrb[0].mxu0
  %234 = vmatprep.mubr.bf16.mxu0 0
  %235 = vmatmul.mubr.bf16.gmra.mrb[0].mxu0 %v124
  %v236 = vpop.f32.mrb[0].mxu0
  %v237 = vadd.f32 0.0, %v236
  %v238 = vpop.f32.mrb[0].mxu0
  %v239 = vpop.f32.mrb[0].mxu0
  %v240 = vadd.f32 0.0, %v239
  %v241 = vpop.f32.mrb[0].mxu0
  %242 = vmatprep.mubr.bf16.mxu0 0
  %243 = vmatmul.mubr.bf16.gmra.mrb[0].mxu0 %v125
  %v244 = vpop.f32.mrb[0].mxu0
  %v245 = vadd.f32 0.0, %v244
  %v246 = vpop.f32.mrb[0].mxu0
  %v247 = vpop.f32.mrb[0].mxu0
  %v248 = vadd.f32 0.0, %v247
  %v249 = vpop.f32.mrb[0].mxu0
  %250 = vmatprep.mubr.bf16.mxu0 0
  %251 = vmatmul.mubr.bf16.gmra.mrb[0].mxu0 %v126
  %v252 = vpop.f32.mrb[0].mxu0
  %v253 = vadd.f32 0.0, %v252
  %v254 = vpop.f32.mrb[0].mxu0
  %v255 = vpop.f32.mrb[0].mxu0
  %v256 = vadd.f32 0.0, %v255
  %v257 = vpop.f32.mrb[0].mxu0
  %258 = vmatprep.mubr.bf16.mxu0 0
  %259 = vmatmul.mubr.bf16.gmra.mrb[0].mxu0 %v127
  %v260 = vpop.f32.mrb[0].mxu0
  %v261 = vadd.f32 0.0, %v260
  %v262 = vpop.f32.mrb[0].mxu0
  %v263 = vpop.f32.mrb[0].mxu0
  %v264 = vadd.f32 0.0, %v263
  %v265 = vpop.f32.mrb[0].mxu0
  %266 = vmatprep.mubr.bf16.mxu0 0
  %267 = vmatmul.mubr.bf16.gmra.mrb[0].mxu0 %v128
  %v268 = vpop.f32.mrb[0].mxu0
  %v269 = vadd.f32 0.0, %v268
  %v270 = vpop.f32.mrb[0].mxu0
  %v271 = vpop.f32.mrb[0].mxu0
  %v272 = vadd.f32 0.0, %v271
  %v273 = vpop.f32.mrb[0].mxu0
  %274 = vmatprep.mubr.bf16.mxu0 0
  %275 = vmatmul.mubr.bf16.gmra.mrb[0].mxu0 %v129
  %v276 = vpop.f32.mrb[0].mxu0
  %v277 = vadd.f32 0.0, %v276
  %v278 = vpop.f32.mrb[0].mxu0
  %v279 = vpop.f32.mrb[0].mxu0
  %v280 = vadd.f32 0.0, %v279
  %v281 = vpop.f32.mrb[0].mxu0
  %282 = vdwg.mxu0
  %v283 = vld [vmem:[%s2] sm:$0xff]
  %v284 = vld [vmem:[%s2 + $0x8] sm:$0xff]
  %v285 = vld [vmem:[%s2 + $0x10] sm:$0xff]
  %v286 = vld [vmem:[%s2 + $0x18] sm:$0xff]
  %v287 = vld [vmem:[%s2 + $0x20] sm:$0xff]
  %v288 = vld [vmem:[%s2 + $0x28] sm:$0xff]
  %v289 = vld [vmem:[%s2 + $0x30] sm:$0xff]
  %v290 = vld [vmem:[%s2 + $0x38] sm:$0xff]
  %v291 = vld [vmem:[%s2 + $0x40] sm:$0xff]
  %v292 = vld [vmem:[%s2 + $0x48] sm:$0xff]
  %v293 = vld [vmem:[%s2 + $0x50] sm:$0xff]
  %v294 = vld [vmem:[%s2 + $0x58] sm:$0xff]
  %v295 = vld [vmem:[%s2 + $0x60] sm:$0xff]
  %v296 = vld [vmem:[%s2 + $0x68] sm:$0xff]
  %v297 = vld [vmem:[%s2 + $0x70] sm:$0xff]
  %v298 = vld [vmem:[%s2 + $0x78] sm:$0xff]
  %300 = vset.pattern.permute.xlu0 0
  %301 = vperm.xlu0 %300, %v283
  %v302 = vpop.permute.xlu0 %301
  %305 = vset.pattern.permute.xlu0 0
  %306 = vperm.xlu0 %305, %v284
  %v307 = vpop.permute.xlu0 %306
  %310 = vset.pattern.permute.xlu0 0
  %311 = vperm.xlu0 %310, %v285
  %v312 = vpop.permute.xlu0 %311
  %315 = vset.pattern.permute.xlu0 0
  %316 = vperm.xlu0 %315, %v286
  %v317 = vpop.permute.xlu0 %316
  %320 = vset.pattern.permute.xlu0 0
  %321 = vperm.xlu0 %320, %v287
  %v322 = vpop.permute.xlu0 %321
  %325 = vset.pattern.permute.xlu0 0
  %326 = vperm.xlu0 %325, %v288
  %v327 = vpop.permute.xlu0 %326
  %330 = vset.pattern.permute.xlu0 0
  %331 = vperm.xlu0 %330, %v289
  %v332 = vpop.permute.xlu0 %331
  %335 = vset.pattern.permute.xlu0 0
  %336 = vperm.xlu0 %335, %v290
  %v337 = vpop.permute.xlu0 %336
  %340 = vset.pattern.permute.xlu0 0
  %341 = vperm.xlu0 %340, %v291
  %v342 = vpop.permute.xlu0 %341
  %345 = vset.pattern.permute.xlu0 0
  %346 = vperm.xlu0 %345, %v292
  %v347 = vpop.permute.xlu0 %346
  %350 = vset.pattern.permute.xlu0 0
  %351 = vperm.xlu0 %350, %v293
  %v352 = vpop.permute.xlu0 %351
  %355 = vset.pattern.permute.xlu0 0
  %356 = vperm.xlu0 %355, %v294
  %v357 = vpop.permute.xlu0 %356
  %360 = vset.pattern.permute.xlu0 0
  %361 = vperm.xlu0 %360, %v295
  %v362 = vpop.permute.xlu0 %361
  %365 = vset.pattern.permute.xlu0 0
  %366 = vperm.xlu0 %365, %v296
  %v367 = vpop.permute.xlu0 %366
  %370 = vset.pattern.permute.xlu0 0
  %371 = vperm.xlu0 %370, %v297
  %v372 = vpop.permute.xlu0 %371
  %375 = vset.pattern.permute.xlu0 0
  %376 = vperm.xlu0 %375, %v298
  %v377 = vpop.permute.xlu0 %376
  %v379 = vmul.f32 %v221, %v302
  %v380 = vmul.f32 %v224, %v307
  %v381 = vmul.f32 %v229, %v312
  %v382 = vmul.f32 %v232, %v317
  %v383 = vmul.f32 %v237, %v322
  %v384 = vmul.f32 %v240, %v327
  %v385 = vmul.f32 %v245, %v332
  %v386 = vmul.f32 %v248, %v337
  %v387 = vmul.f32 %v253, %v342
  %v388 = vmul.f32 %v256, %v347
  %v389 = vmul.f32 %v261, %v352
  %v390 = vmul.f32 %v264, %v357
  %v391 = vmul.f32 %v269, %v362
  %v392 = vmul.f32 %v272, %v367
  %v393 = vmul.f32 %v277, %v372
  %v394 = vmul.f32 %v280, %v377
  %v395 = vpack.c.bf16 %v380, %v379
  %v396 = vpack.c.bf16 %v382, %v381
  %v397 = vpack.c.bf16 %v384, %v383
  %v398 = vpack.c.bf16 %v386, %v385
  %v399 = vpack.c.bf16 %v388, %v387
  %v400 = vpack.c.bf16 %v390, %v389
  %v401 = vpack.c.bf16 %v392, %v391
  %v402 = vpack.c.bf16 %v394, %v393
  %403 = vmatprep.subr.bf16.mxu0 0
  %404 = vmatpush1.bf16.msra.mxu0 %v395
  %405 = vmatprep.subr.bf16.mxu0 0
  %406 = vmatpush1.bf16.msra.mxu0 %v396
  %407 = vmatprep.subr.bf16.mxu0 0
  %408 = vmatpush1.bf16.msra.mxu0 %v397
  %409 = vmatprep.subr.bf16.mxu0 0
  %410 = vmatpush1.bf16.msra.mxu0 %v398
  %411 = vmatprep.subr.bf16.mxu0 0
  %412 = vmatpush1.bf16.msra.mxu0 %v399
  %413 = vmatprep.subr.bf16.mxu0 0
  %414 = vmatpush1.bf16.msra.mxu0 %v400
  %415 = vmatprep.subr.bf16.mxu0 0
  %416 = vmatpush1.bf16.msra.mxu0 %v401
  %417 = vmatprep.subr.bf16.mxu0 0
  %418 = vmatpush1.bf16.msra.mxu0 %v402
  %419 = vmatprep.subr.bf16.mxu0 0
  %420 = vmatpush1.bf16.msra.mxu0 0
  %421 = vmatprep.subr.bf16.mxu0 0
  %422 = vmatpush1.bf16.msra.mxu0 0
  %423 = vmatprep.subr.bf16.mxu0 0
  %424 = vmatpush1.bf16.msra.mxu0 0
  %425 = vmatprep.subr.bf16.mxu0 0
  %426 = vmatpush1.bf16.msra.mxu0 0
  %427 = vmatprep.subr.bf16.mxu0 0
  %428 = vmatpush1.bf16.msra.mxu0 0
  %429 = vmatprep.subr.bf16.mxu0 0
  %430 = vmatpush1.bf16.msra.mxu0 0
  %431 = vmatprep.subr.bf16.mxu0 0
  %432 = vmatpush1.bf16.msra.mxu0 0
  %433 = vmatprep.subr.bf16.mxu0 0
  %434 = vmatpush1.bf16.msra.mxu0 0
  %435 = vmatprep.mubr.bf16.mxu0 0
  %436 = vmatmul.mubr.bf16.gmra.mrb[0].mxu0 %v122
  %v437 = vpop.f32.mrb[0].mxu0
  %v438 = vadd.f32 0.0, %v437
  %v439 = vpop.f32.mrb[0].mxu0
  %v440 = vpop.f32.mrb[0].mxu0
  %v441 = vadd.f32 0.0, %v440
  %v442 = vpop.f32.mrb[0].mxu0
  %443 = vmatprep.mubr.bf16.mxu0 0
  %444 = vmatmul.mubr.bf16.gmra.mrb[0].mxu0 %v123
  %v445 = vpop.f32.mrb[0].mxu0
  %v446 = vadd.f32 0.0, %v445
  %v447 = vpop.f32.mrb[0].mxu0
  %v448 = vpop.f32.mrb[0].mxu0
  %v449 = vadd.f32 0.0, %v448
  %v450 = vpop.f32.mrb[0].mxu0
  %451 = vmatprep.mubr.bf16.mxu0 0
  %452 = vmatmul.mubr.bf16.gmra.mrb[0].mxu0 %v124
  %v453 = vpop.f32.mrb[0].mxu0
  %v454 = vadd.f32 0.0, %v453
  %v455 = vpop.f32.mrb[0].mxu0
  %v456 = vpop.f32.mrb[0].mxu0
  %v457 = vadd.f32 0.0, %v456
  %v458 = vpop.f32.mrb[0].mxu0
  %459 = vmatprep.mubr.bf16.mxu0 0
  %460 = vmatmul.mubr.bf16.gmra.mrb[0].mxu0 %v125
  %v461 = vpop.f32.mrb[0].mxu0
  %v462 = vadd.f32 0.0, %v461
  %v463 = vpop.f32.mrb[0].mxu0
  %v464 = vpop.f32.mrb[0].mxu0
  %v465 = vadd.f32 0.0, %v464
  %v466 = vpop.f32.mrb[0].mxu0
  %467 = vmatprep.mubr.bf16.mxu0 0
  %468 = vmatmul.mubr.bf16.gmra.mrb[0].mxu0 %v126
  %v469 = vpop.f32.mrb[0].mxu0
  %v470 = vadd.f32 0.0, %v469
  %v471 = vpop.f32.mrb[0].mxu0
  %v472 = vpop.f32.mrb[0].mxu0
  %v473 = vadd.f32 0.0, %v472
  %v474 = vpop.f32.mrb[0].mxu0
  %475 = vmatprep.mubr.bf16.mxu0 0
  %476 = vmatmul.mubr.bf16.gmra.mrb[0].mxu0 %v127
  %v477 = vpop.f32.mrb[0].mxu0
  %v478 = vadd.f32 0.0, %v477
  %v479 = vpop.f32.mrb[0].mxu0
  %v480 = vpop.f32.mrb[0].mxu0
  %v481 = vadd.f32 0.0, %v480
  %v482 = vpop.f32.mrb[0].mxu0
  %483 = vmatprep.mubr.bf16.mxu0 0
  %484 = vmatmul.mubr.bf16.gmra.mrb[0].mxu0 %v128
  %v485 = vpop.f32.mrb[0].mxu0
  %v486 = vadd.f32 0.0, %v485
  %v487 = vpop.f32.mrb[0].mxu0
  %v488 = vpop.f32.mrb[0].mxu0
  %v489 = vadd.f32 0.0, %v488
  %v490 = vpop.f32.mrb[0].mxu0
  %491 = vmatprep.mubr.bf16.mxu0 0
  %492 = vmatmul.mubr.bf16.gmra.mrb[0].mxu0 %v129
  %v493 = vpop.f32.mrb[0].mxu0
  %v494 = vadd.f32 0.0, %v493
  %v495 = vpop.f32.mrb[0].mxu0
  %v496 = vpop.f32.mrb[0].mxu0
  %v497 = vadd.f32 0.0, %v496
  %v498 = vpop.f32.mrb[0].mxu0
  %499 = vdwg.mxu0
  %v500 = vmul.f32 %v438, %v302
  %v501 = vmul.f32 %v441, %v307
  %v502 = vmul.f32 %v446, %v312
  %v503 = vmul.f32 %v449, %v317
  %v504 = vmul.f32 %v454, %v322
  %v505 = vmul.f32 %v457, %v327
  %v506 = vmul.f32 %v462, %v332
  %v507 = vmul.f32 %v465, %v337
  %v508 = vmul.f32 %v470, %v342
  %v509 = vmul.f32 %v473, %v347
  %v510 = vmul.f32 %v478, %v352
  %v511 = vmul.f32 %v481, %v357
  %v512 = vmul.f32 %v486, %v362
  %v513 = vmul.f32 %v489, %v367
  %v514 = vmul.f32 %v494, %v372
  %v515 = vmul.f32 %v497, %v377
  %v516 = vpack.c.bf16 %v501, %v500
  %v517 = vpack.c.bf16 %v503, %v502
  %v518 = vpack.c.bf16 %v505, %v504
  %v519 = vpack.c.bf16 %v507, %v506
  %v520 = vpack.c.bf16 %v509, %v508
  %v521 = vpack.c.bf16 %v511, %v510
  %v522 = vpack.c.bf16 %v513, %v512
  %v523 = vpack.c.bf16 %v515, %v514
  %524 = vmatprep.subr.bf16.mxu0 0
  %525 = vmatpush1.bf16.msra.mxu0 %v516
  %526 = vmatprep.subr.bf16.mxu0 0
  %527 = vmatpush1.bf16.msra.mxu0 %v517
  %528 = vmatprep.subr.bf16.mxu0 0
  %529 = vmatpush1.bf16.msra.mxu0 %v518
  %530 = vmatprep.subr.bf16.mxu0 0
  %531 = vmatpush1.bf16.msra.mxu0 %v519
  %532 = vmatprep.subr.bf16.mxu0 0
  %533 = vmatpush1.bf16.msra.mxu0 %v520
  %534 = vmatprep.subr.bf16.mxu0 0
  %535 = vmatpush1.bf16.msra.mxu0 %v521
  %536 = vmatprep.subr.bf16.mxu0 0
  %537 = vmatpush1.bf16.msra.mxu0 %v522
  %538 = vmatprep.subr.bf16.mxu0 0
  %539 = vmatpush1.bf16.msra.mxu0 %v523
  %540 = vmatprep.subr.bf16.mxu0 0
  %541 = vmatpush1.bf16.msra.mxu0 0
  %542 = vmatprep.subr.bf16.mxu0 0
  %543 = vmatpush1.bf16.msra.mxu0 0
  %544 = vmatprep.subr.bf16.mxu0 0
  %545 = vmatpush1.bf16.msra.mxu0 0
  %546 = vmatprep.subr.bf16.mxu0 0
  %547 = vmatpush1.bf16.msra.mxu0 0
  %548 = vmatprep.subr.bf16.mxu0 0
  %549 = vmatpush1.bf16.msra.mxu0 0
  %550 = vmatprep.subr.bf16.mxu0 0
  %551 = vmatpush1.bf16.msra.mxu0 0
  %552 = vmatprep.subr.bf16.mxu0 0
  %553 = vmatpush1.bf16.msra.mxu0 0
  %554 = vmatprep.subr.bf16.mxu0 0
  %555 = vmatpush1.bf16.msra.mxu0 0
  %556 = vmatprep.mubr.bf16.mxu0 0
  %557 = vmatmul.mubr.bf16.gmra.mrb[0].mxu0 %v122
  %v558 = vpop.f32.mrb[0].mxu0
  %v559 = vadd.f32 0.0, %v558
  %v560 = vpop.f32.mrb[0].mxu0
  %v561 = vpop.f32.mrb[0].mxu0
  %v562 = vadd.f32 0.0, %v561
  %v563 = vpop.f32.mrb[0].mxu0
  %564 = vmatprep.mubr.bf16.mxu0 0
  %565 = vmatmul.mubr.bf16.gmra.mrb[0].mxu0 %v123
  %v566 = vpop.f32.mrb[0].mxu0
  %v567 = vadd.f32 0.0, %v566
  %v568 = vpop.f32.mrb[0].mxu0
  %v569 = vpop.f32.mrb[0].mxu0
  %v570 = vadd.f32 0.0, %v569
  %v571 = vpop.f32.mrb[0].mxu0
  %572 = vmatprep.mubr.bf16.mxu0 0
  %573 = vmatmul.mubr.bf16.gmra.mrb[0].mxu0 %v124
  %v574 = vpop.f32.mrb[0].mxu0
  %v575 = vadd.f32 0.0, %v574
  %v576 = vpop.f32.mrb[0].mxu0
  %v577 = vpop.f32.mrb[0].mxu0
  %v578 = vadd.f32 0.0, %v577
  %v579 = vpop.f32.mrb[0].mxu0
  %580 = vmatprep.mubr.bf16.mxu0 0
  %581 = vmatmul.mubr.bf16.gmra.mrb[0].mxu0 %v125
  %v582 = vpop.f32.mrb[0].mxu0
  %v583 = vadd.f32 0.0, %v582
  %v584 = vpop.f32.mrb[0].mxu0
  %v585 = vpop.f32.mrb[0].mxu0
  %v586 = vadd.f32 0.0, %v585
  %v587 = vpop.f32.mrb[0].mxu0
  %588 = vmatprep.mubr.bf16.mxu0 0
  %589 = vmatmul.mubr.bf16.gmra.mrb[0].mxu0 %v126
  %v590 = vpop.f32.mrb[0].mxu0
  %v591 = vadd.f32 0.0, %v590
  %v592 = vpop.f32.mrb[0].mxu0
  %v593 = vpop.f32.mrb[0].mxu0
  %v594 = vadd.f32 0.0, %v593
  %v595 = vpop.f32.mrb[0].mxu0
  %596 = vmatprep.mubr.bf16.mxu0 0
  %597 = vmatmul.mubr.bf16.gmra.mrb[0].mxu0 %v127
  %v598 = vpop.f32.mrb[0].mxu0
  %v599 = vadd.f32 0.0, %v598
  %v600 = vpop.f32.mrb[0].mxu0
  %v601 = vpop.f32.mrb[0].mxu0
  %v602 = vadd.f32 0.0, %v601
  %v603 = vpop.f32.mrb[0].mxu0
  %604 = vmatprep.mubr.bf16.mxu0 0
  %605 = vmatmul.mubr.bf16.gmra.mrb[0].mxu0 %v128
  %v606 = vpop.f32.mrb[0].mxu0
  %v607 = vadd.f32 0.0, %v606
  %v608 = vpop.f32.mrb[0].mxu0
  %v609 = vpop.f32.mrb[0].mxu0
  %v610 = vadd.f32 0.0, %v609
  %v611 = vpop.f32.mrb[0].mxu0
  %612 = vmatprep.mubr.bf16.mxu0 0
  %613 = vmatmul.mubr.bf16.gmra.mrb[0].mxu0 %v129
  %v614 = vpop.f32.mrb[0].mxu0
  %v615 = vadd.f32 0.0, %v614
  %v616 = vpop.f32.mrb[0].mxu0
  %v617 = vpop.f32.mrb[0].mxu0
  %v618 = vadd.f32 0.0, %v617
  %v619 = vpop.f32.mrb[0].mxu0
  %620 = vdwg.mxu0
  %v621 = vld [vmem:[%s3] sm:$0xff]
  %v622 = vld [vmem:[%s3 + $0x8] sm:$0xff]
  %v623 = vld [vmem:[%s3 + $0x10] sm:$0xff]
  %v624 = vld [vmem:[%s3 + $0x18] sm:$0xff]
  %v625 = vld [vmem:[%s3 + $0x20] sm:$0xff]
  %v626 = vld [vmem:[%s3 + $0x28] sm:$0xff]
  %v627 = vld [vmem:[%s3 + $0x30] sm:$0xff]
  %v628 = vld [vmem:[%s3 + $0x38] sm:$0xff]
  %v629 = vld [vmem:[%s3 + $0x40] sm:$0xff]
  %v630 = vld [vmem:[%s3 + $0x48] sm:$0xff]
  %v631 = vld [vmem:[%s3 + $0x50] sm:$0xff]
  %v632 = vld [vmem:[%s3 + $0x58] sm:$0xff]
  %v633 = vld [vmem:[%s3 + $0x60] sm:$0xff]
  %v634 = vld [vmem:[%s3 + $0x68] sm:$0xff]
  %v635 = vld [vmem:[%s3 + $0x70] sm:$0xff]
  %v636 = vld [vmem:[%s3 + $0x78] sm:$0xff]
  %638 = vset.pattern.permute.xlu0 0
  %639 = vperm.xlu0 %638, %v621
  %v640 = vpop.permute.xlu0 %639
  %643 = vset.pattern.permute.xlu0 0
  %644 = vperm.xlu0 %643, %v622
  %v645 = vpop.permute.xlu0 %644
  %648 = vset.pattern.permute.xlu0 0
  %649 = vperm.xlu0 %648, %v623
  %v650 = vpop.permute.xlu0 %649
  %653 = vset.pattern.permute.xlu0 0
  %654 = vperm.xlu0 %653, %v624
  %v655 = vpop.permute.xlu0 %654
  %658 = vset.pattern.permute.xlu0 0
  %659 = vperm.xlu0 %658, %v625
  %v660 = vpop.permute.xlu0 %659
  %663 = vset.pattern.permute.xlu0 0
  %664 = vperm.xlu0 %663, %v626
  %v665 = vpop.permute.xlu0 %664
  %668 = vset.pattern.permute.xlu0 0
  %669 = vperm.xlu0 %668, %v627
  %v670 = vpop.permute.xlu0 %669
  %673 = vset.pattern.permute.xlu0 0
  %674 = vperm.xlu0 %673, %v628
  %v675 = vpop.permute.xlu0 %674
  %678 = vset.pattern.permute.xlu0 0
  %679 = vperm.xlu0 %678, %v629
  %v680 = vpop.permute.xlu0 %679
  %683 = vset.pattern.permute.xlu0 0
  %684 = vperm.xlu0 %683, %v630
  %v685 = vpop.permute.xlu0 %684
  %688 = vset.pattern.permute.xlu0 0
  %689 = vperm.xlu0 %688, %v631
  %v690 = vpop.permute.xlu0 %689
  %693 = vset.pattern.permute.xlu0 0
  %694 = vperm.xlu0 %693, %v632
  %v695 = vpop.permute.xlu0 %694
  %698 = vset.pattern.permute.xlu0 0
  %699 = vperm.xlu0 %698, %v633
  %v700 = vpop.permute.xlu0 %699
  %703 = vset.pattern.permute.xlu0 0
  %704 = vperm.xlu0 %703, %v634
  %v705 = vpop.permute.xlu0 %704
  %708 = vset.pattern.permute.xlu0 0
  %709 = vperm.xlu0 %708, %v635
  %v710 = vpop.permute.xlu0 %709
  %713 = vset.pattern.permute.xlu0 0
  %714 = vperm.xlu0 %713, %v636
  %v715 = vpop.permute.xlu0 %714
  %v717 = vmul.f32 %v559, %v640
  %v718 = vmul.f32 %v562, %v645
  %v719 = vmul.f32 %v567, %v650
  %v720 = vmul.f32 %v570, %v655
  %v721 = vmul.f32 %v575, %v660
  %v722 = vmul.f32 %v578, %v665
  %v723 = vmul.f32 %v583, %v670
  %v724 = vmul.f32 %v586, %v675
  %v725 = vmul.f32 %v591, %v680
  %v726 = vmul.f32 %v594, %v685
  %v727 = vmul.f32 %v599, %v690
  %v728 = vmul.f32 %v602, %v695
  %v729 = vmul.f32 %v607, %v700
  %v730 = vmul.f32 %v610, %v705
  %v731 = vmul.f32 %v615, %v710
  %v732 = vmul.f32 %v618, %v715
  %v733 = vpack.c.bf16 %v718, %v717
  %v734 = vpack.c.bf16 %v720, %v719
  %v735 = vpack.c.bf16 %v722, %v721
  %v736 = vpack.c.bf16 %v724, %v723
  %v737 = vpack.c.bf16 %v726, %v725
  %v738 = vpack.c.bf16 %v728, %v727
  %v739 = vpack.c.bf16 %v730, %v729
  %v740 = vpack.c.bf16 %v732, %v731
  %v741 = vld [vmem:[%s6] sm:$0xf]
  %v742 = vld [vmem:[%s6 + $0x4] sm:$0xf]
  %v743 = vld [vmem:[%s6 + $0x8] sm:$0xf]
  %v744 = vld [vmem:[%s6 + $0xc] sm:$0xf]
  %v745 = vld [vmem:[%s6 + $0x10] sm:$0xf]
  %v746 = vld [vmem:[%s6 + $0x14] sm:$0xf]
  %v747 = vld [vmem:[%s6 + $0x18] sm:$0xf]
  %v748 = vld [vmem:[%s6 + $0x1c] sm:$0xf]
  %v749 = vld [vmem:[%s6 + $0x20] sm:$0xf]
  %v750 = vld [vmem:[%s6 + $0x24] sm:$0xf]
  %v751 = vld [vmem:[%s6 + $0x28] sm:$0xf]
  %v752 = vld [vmem:[%s6 + $0x2c] sm:$0xf]
  %v753 = vld [vmem:[%s6 + $0x30] sm:$0xf]
  %v754 = vld [vmem:[%s6 + $0x34] sm:$0xf]
  %v755 = vld [vmem:[%s6 + $0x38] sm:$0xf]
  %v756 = vld [vmem:[%s6 + $0x3c] sm:$0xf]
  %v757 = vld [vmem:[%s7] sm:$0x1]
  %v759 = vlaneseq
  %v760 = vshrl.u32 %v759, 7
  %v761 = vsub.s32 0, %v760
  %v762 = vrot.slane %v757, %v761
  %v780 = vunpack.c.l.b16 %v741
  %v781 = vunpack.c.l.b16 %v742
  %v782 = vunpack.c.l.b16 %v743
  %v783 = vunpack.c.l.b16 %v744
  %v784 = vunpack.c.l.b16 %v745
  %v785 = vunpack.c.l.b16 %v746
  %v786 = vunpack.c.l.b16 %v747
  %v787 = vunpack.c.l.b16 %v748
  %v788 = vunpack.c.l.b16 %v749
  %v789 = vunpack.c.l.b16 %v750
  %v790 = vunpack.c.l.b16 %v751
  %v791 = vunpack.c.l.b16 %v752
  %v792 = vunpack.c.l.b16 %v753
  %v793 = vunpack.c.l.b16 %v754
  %v794 = vunpack.c.l.b16 %v755
  %v795 = vunpack.c.l.b16 %v756
  %v796 = vpack.c.b16 %v781, %v780
  %v797 = vpack.c.b16 %v783, %v782
  %v798 = vpack.c.b16 %v785, %v784
  %v799 = vpack.c.b16 %v787, %v786
  %v800 = vpack.c.b16 %v789, %v788
  %v801 = vpack.c.b16 %v791, %v790
  %v802 = vpack.c.b16 %v793, %v792
  %v803 = vpack.c.b16 %v795, %v794
  %812 = vmatprep.subr.bf16.mxu0 0
  %813 = vmatpush1.bf16.msra.mxu0 %v796
  %814 = vmatprep.subr.bf16.mxu0 0
  %815 = vmatpush1.bf16.msra.mxu0 %v797
  %816 = vmatprep.subr.bf16.mxu0 0
  %817 = vmatpush1.bf16.msra.mxu0 %v798
  %818 = vmatprep.subr.bf16.mxu0 0
  %819 = vmatpush1.bf16.msra.mxu0 %v799
  %820 = vmatprep.subr.bf16.mxu0 0
  %821 = vmatpush1.bf16.msra.mxu0 %v800
  %822 = vmatprep.subr.bf16.mxu0 0
  %823 = vmatpush1.bf16.msra.mxu0 %v801
  %824 = vmatprep.subr.bf16.mxu0 0
  %825 = vmatpush1.bf16.msra.mxu0 %v802
  %826 = vmatprep.subr.bf16.mxu0 0
  %827 = vmatpush1.bf16.msra.mxu0 %v803
  %828 = vmatprep.subr.bf16.mxu0 0
  %829 = vmatpush1.bf16.msra.mxu0 0
  %830 = vmatprep.subr.bf16.mxu0 0
  %831 = vmatpush1.bf16.msra.mxu0 0
  %832 = vmatprep.subr.bf16.mxu0 0
  %833 = vmatpush1.bf16.msra.mxu0 0
  %834 = vmatprep.subr.bf16.mxu0 0
  %835 = vmatpush1.bf16.msra.mxu0 0
  %836 = vmatprep.subr.bf16.mxu0 0
  %837 = vmatpush1.bf16.msra.mxu0 0
  %838 = vmatprep.subr.bf16.mxu0 0
  %839 = vmatpush1.bf16.msra.mxu0 0
  %840 = vmatprep.subr.bf16.mxu0 0
  %841 = vmatpush1.bf16.msra.mxu0 0
  %842 = vmatprep.subr.bf16.mxu0 0
  %843 = vmatpush1.bf16.msra.mxu0 0
  %844 = vmatprep.mubr.bf16.mxu0 0
  %845 = vmatmul.mubr.bf16.gmra.mrb[0].mxu0 %v733
  %v846 = vpop.f32.mrb[0].mxu0
  %v847 = vadd.f32 %v762, %v846
  %v848 = vpop.f32.mrb[0].mxu0
  %v849 = vpop.f32.mrb[0].mxu0
  %v850 = vadd.f32 %v762, %v849
  %v851 = vpop.f32.mrb[0].mxu0
  %852 = vmatprep.mubr.bf16.mxu0 0
  %853 = vmatmul.mubr.bf16.gmra.mrb[0].mxu0 %v734
  %v854 = vpop.f32.mrb[0].mxu0
  %v855 = vadd.f32 %v762, %v854
  %v856 = vpop.f32.mrb[0].mxu0
  %v857 = vpop.f32.mrb[0].mxu0
  %v858 = vadd.f32 %v762, %v857
  %v859 = vpop.f32.mrb[0].mxu0
  %860 = vmatprep.mubr.bf16.mxu0 0
  %861 = vmatmul.mubr.bf16.gmra.mrb[0].mxu0 %v735
  %v862 = vpop.f32.mrb[0].mxu0
  %v863 = vadd.f32 %v762, %v862
  %v864 = vpop.f32.mrb[0].mxu0
  %v865 = vpop.f32.mrb[0].mxu0
  %v866 = vadd.f32 %v762, %v865
  %v867 = vpop.f32.mrb[0].mxu0
  %868 = vmatprep.mubr.bf16.mxu0 0
  %869 = vmatmul.mubr.bf16.gmra.mrb[0].mxu0 %v736
  %v870 = vpop.f32.mrb[0].mxu0
  %v871 = vadd.f32 %v762, %v870
  %v872 = vpop.f32.mrb[0].mxu0
  %v873 = vpop.f32.mrb[0].mxu0
  %v874 = vadd.f32 %v762, %v873
  %v875 = vpop.f32.mrb[0].mxu0
  %876 = vmatprep.mubr.bf16.mxu0 0
  %877 = vmatmul.mubr.bf16.gmra.mrb[0].mxu0 %v737
  %v878 = vpop.f32.mrb[0].mxu0
  %v879 = vadd.f32 %v762, %v878
  %v880 = vpop.f32.mrb[0].mxu0
  %v881 = vpop.f32.mrb[0].mxu0
  %v882 = vadd.f32 %v762, %v881
  %v883 = vpop.f32.mrb[0].mxu0
  %884 = vmatprep.mubr.bf16.mxu0 0
  %885 = vmatmul.mubr.bf16.gmra.mrb[0].mxu0 %v738
  %v886 = vpop.f32.mrb[0].mxu0
  %v887 = vadd.f32 %v762, %v886
  %v888 = vpop.f32.mrb[0].mxu0
  %v889 = vpop.f32.mrb[0].mxu0
  %v890 = vadd.f32 %v762, %v889
  %v891 = vpop.f32.mrb[0].mxu0
  %892 = vmatprep.mubr.bf16.mxu0 0
  %893 = vmatmul.mubr.bf16.gmra.mrb[0].mxu0 %v739
  %v894 = vpop.f32.mrb[0].mxu0
  %v895 = vadd.f32 %v762, %v894
  %v896 = vpop.f32.mrb[0].mxu0
  %v897 = vpop.f32.mrb[0].mxu0
  %v898 = vadd.f32 %v762, %v897
  %v899 = vpop.f32.mrb[0].mxu0
  %900 = vmatprep.mubr.bf16.mxu0 0
  %901 = vmatmul.mubr.bf16.gmra.mrb[0].mxu0 %v740
  %v902 = vpop.f32.mrb[0].mxu0
  %v903 = vadd.f32 %v762, %v902
  %v904 = vpop.f32.mrb[0].mxu0
  %v905 = vpop.f32.mrb[0].mxu0
  %v906 = vadd.f32 %v762, %v905
  %v907 = vpop.f32.mrb[0].mxu0
  %908 = vdwg.mxu0
  %v909 = vmax.f32 %v847, 0.0
  %v910 = vmax.f32 %v850, 0.0
  %v911 = vmax.f32 %v855, 0.0
  %v912 = vmax.f32 %v858, 0.0
  %v913 = vmax.f32 %v863, 0.0
  %v914 = vmax.f32 %v866, 0.0
  %v915 = vmax.f32 %v871, 0.0
  %v916 = vmax.f32 %v874, 0.0
  %v917 = vmax.f32 %v879, 0.0
  %v918 = vmax.f32 %v882, 0.0
  %v919 = vmax.f32 %v887, 0.0
  %v920 = vmax.f32 %v890, 0.0
  %v921 = vmax.f32 %v895, 0.0
  %v922 = vmax.f32 %v898, 0.0
  %v923 = vmax.f32 %v903, 0.0
  %v924 = vmax.f32 %v906, 0.0
  %v925 = vld [vmem:[%s4] sm:$0xf]
  %v926 = vpack.c.bf16 %v910, %v909
  %v927 = vpack.c.bf16 %v912, %v911
  %v928 = vpack.c.bf16 %v914, %v913
  %v929 = vpack.c.bf16 %v916, %v915
  %v930 = vpack.c.bf16 %v918, %v917
  %v931 = vpack.c.bf16 %v920, %v919
  %v932 = vpack.c.bf16 %v922, %v921
  %v933 = vpack.c.bf16 %v924, %v923
  %934 = vmatprep.subr.bf16.mxu0 0
  %935 = vmatpush1.bf16.msra.mxu0 %v926
  %936 = vmatprep.subr.bf16.mxu0 0
  %937 = vmatpush1.bf16.msra.mxu0 %v927
  %938 = vmatprep.subr.bf16.mxu0 0
  %939 = vmatpush1.bf16.msra.mxu0 %v928
  %940 = vmatprep.subr.bf16.mxu0 0
  %941 = vmatpush1.bf16.msra.mxu0 %v929
  %942 = vmatprep.subr.bf16.mxu0 0
  %943 = vmatpush1.bf16.msra.mxu0 %v930
  %944 = vmatprep.subr.bf16.mxu0 0
  %945 = vmatpush1.bf16.msra.mxu0 %v931
  %946 = vmatprep.subr.bf16.mxu0 0
  %947 = vmatpush1.bf16.msra.mxu0 %v932
  %948 = vmatprep.subr.bf16.mxu0 0
  %949 = vmatpush1.bf16.msra.mxu0 %v933
  %950 = vmatprep.subr.bf16.mxu0 0
  %951 = vmatpush1.bf16.msra.mxu0 0
  %952 = vmatprep.subr.bf16.mxu0 0
  %953 = vmatpush1.bf16.msra.mxu0 0
  %954 = vmatprep.subr.bf16.mxu0 0
  %955 = vmatpush1.bf16.msra.mxu0 0
  %956 = vmatprep.subr.bf16.mxu0 0
  %957 = vmatpush1.bf16.msra.mxu0 0
  %958 = vmatprep.subr.bf16.mxu0 0
  %959 = vmatpush1.bf16.msra.mxu0 0
  %960 = vmatprep.subr.bf16.mxu0 0
  %961 = vmatpush1.bf16.msra.mxu0 0
  %962 = vmatprep.subr.bf16.mxu0 0
  %963 = vmatpush1.bf16.msra.mxu0 0
  %964 = vmatprep.subr.bf16.mxu0 0
  %965 = vmatpush1.bf16.msra.mxu0 0
  %966 = vmatprep.mubr.bf16.mxu0 0
  %967 = vmatmul.mubr.bf16.gmra.mrb[0].mxu0 %v925
  %v968 = vpop.f32.mrb[0].mxu0
  %v969 = vadd.f32 0.0, %v968
  %v970 = vpop.f32.mrb[0].mxu0
  %v971 = vpop.f32.mrb[0].mxu0
  %v972 = vpop.f32.mrb[0].mxu0
  %973 = vdwg.mxu0
  %v974 = vld [vmem:[%s5] sm:$0xff]
  %976 = vset.pattern.permute.xlu0 0
  %977 = vperm.xlu0 %976, %v974
  %v978 = vpop.permute.xlu0 %977
  %v980 = vmul.f32 %v969, %v978
  %v981 = vpack.c.bf16 %v980, %v980
  %v982 = vld [vmem:[%s8] sm:$0xf]
  %v983 = vld [vmem:[%s8 + $0x4] sm:$0xf]
  %v984 = vld [vmem:[%s8 + $0x8] sm:$0xf]
  %v985 = vld [vmem:[%s8 + $0xc] sm:$0xf]
  %v986 = vld [vmem:[%s8 + $0x10] sm:$0xf]
  %v987 = vld [vmem:[%s8 + $0x14] sm:$0xf]
  %v988 = vld [vmem:[%s8 + $0x18] sm:$0xf]
  %v989 = vld [vmem:[%s8 + $0x1c] sm:$0xf]
  %v990 = vld [vmem:[%s8 + $0x20] sm:$0xf]
  %v991 = vld [vmem:[%s8 + $0x24] sm:$0xf]
  %v992 = vld [vmem:[%s8 + $0x28] sm:$0xf]
  %v993 = vld [vmem:[%s8 + $0x2c] sm:$0xf]
  %v994 = vld [vmem:[%s8 + $0x30] sm:$0xf]
  %v995 = vld [vmem:[%s8 + $0x34] sm:$0xf]
  %v996 = vld [vmem:[%s8 + $0x38] sm:$0xf]
  %v997 = vld [vmem:[%s8 + $0x3c] sm:$0xf]
  %v998 = vld [vmem:[%s9] sm:$0x1]
  %v1000 = vlaneseq
  %v1001 = vshrl.u32 %v1000, 7
  %v1002 = vsub.s32 0, %v1001
  %v1003 = vrot.slane %v998, %v1002
  %v1021 = vunpack.c.l.b16 %v982
  %v1022 = vunpack.c.l.b16 %v983
  %v1023 = vunpack.c.l.b16 %v984
  %v1024 = vunpack.c.l.b16 %v985
  %v1025 = vunpack.c.l.b16 %v986
  %v1026 = vunpack.c.l.b16 %v987
  %v1027 = vunpack.c.l.b16 %v988
  %v1028 = vunpack.c.l.b16 %v989
  %v1029 = vunpack.c.l.b16 %v990
  %v1030 = vunpack.c.l.b16 %v991
  %v1031 = vunpack.c.l.b16 %v992
  %v1032 = vunpack.c.l.b16 %v993
  %v1033 = vunpack.c.l.b16 %v994
  %v1034 = vunpack.c.l.b16 %v995
  %v1035 = vunpack.c.l.b16 %v996
  %v1036 = vunpack.c.l.b16 %v997
  %v1037 = vpack.c.b16 %v1022, %v1021
  %v1038 = vpack.c.b16 %v1024, %v1023
  %v1039 = vpack.c.b16 %v1026, %v1025
  %v1040 = vpack.c.b16 %v1028, %v1027
  %v1041 = vpack.c.b16 %v1030, %v1029
  %v1042 = vpack.c.b16 %v1032, %v1031
  %v1043 = vpack.c.b16 %v1034, %v1033
  %v1044 = vpack.c.b16 %v1036, %v1035
  %1053 = vmatprep.subr.bf16.mxu0 0
  %1054 = vmatpush1.bf16.msra.mxu0 %v1037
  %1055 = vmatprep.subr.bf16.mxu0 0
  %1056 = vmatpush1.bf16.msra.mxu0 %v1038
  %1057 = vmatprep.subr.bf16.mxu0 0
  %1058 = vmatpush1.bf16.msra.mxu0 %v1039
  %1059 = vmatprep.subr.bf16.mxu0 0
  %1060 = vmatpush1.bf16.msra.mxu0 %v1040
  %1061 = vmatprep.subr.bf16.mxu0 0
  %1062 = vmatpush1.bf16.msra.mxu0 %v1041
  %1063 = vmatprep.subr.bf16.mxu0 0
  %1064 = vmatpush1.bf16.msra.mxu0 %v1042
  %1065 = vmatprep.subr.bf16.mxu0 0
  %1066 = vmatpush1.bf16.msra.mxu0 %v1043
  %1067 = vmatprep.subr.bf16.mxu0 0
  %1068 = vmatpush1.bf16.msra.mxu0 %v1044
  %1069 = vmatprep.subr.bf16.mxu0 0
  %1070 = vmatpush1.bf16.msra.mxu0 0
  %1071 = vmatprep.subr.bf16.mxu0 0
  %1072 = vmatpush1.bf16.msra.mxu0 0
  %1073 = vmatprep.subr.bf16.mxu0 0
  %1074 = vmatpush1.bf16.msra.mxu0 0
  %1075 = vmatprep.subr.bf16.mxu0 0
  %1076 = vmatpush1.bf16.msra.mxu0 0
  %1077 = vmatprep.subr.bf16.mxu0 0
  %1078 = vmatpush1.bf16.msra.mxu0 0
  %1079 = vmatprep.subr.bf16.mxu0 0
  %1080 = vmatpush1.bf16.msra.mxu0 0
  %1081 = vmatprep.subr.bf16.mxu0 0
  %1082 = vmatpush1.bf16.msra.mxu0 0
  %1083 = vmatprep.subr.bf16.mxu0 0
  %1084 = vmatpush1.bf16.msra.mxu0 0
  %1085 = vmatprep.mubr.bf16.mxu0 0
  %1086 = vmatmul.mubr.bf16.gmra.mrb[0].mxu0 %v981
  %v1087 = vpop.f32.mrb[0].mxu0
  %v1088 = vadd.f32 %v1003, %v1087
  %v1089 = vpop.f32.mrb[0].mxu0
  %v1090 = vpop.f32.mrb[0].mxu0
  %v1091 = vpop.f32.mrb[0].mxu0
  %1092 = vdwg.mxu0
  %v1093 = vmax.f32 %v1088, 0.0
  %v1094 = vpack.c.bf16 %v1093, %v1093
  %v1095 = vld [vmem:[%s10] sm:$0xf]
  %v1096 = vld [vmem:[%s10 + $0x4] sm:$0xf]
  %v1097 = vld [vmem:[%s10 + $0x8] sm:$0xf]
  %v1098 = vld [vmem:[%s10 + $0xc] sm:$0xf]
  %v1099 = vld [vmem:[%s10 + $0x10] sm:$0xf]
  %v1100 = vld [vmem:[%s10 + $0x14] sm:$0xf]
  %v1101 = vld [vmem:[%s10 + $0x18] sm:$0xf]
  %v1102 = vld [vmem:[%s10 + $0x1c] sm:$0xf]
  %v1103 = vld [vmem:[%s10 + $0x20] sm:$0xf]
  %v1104 = vld [vmem:[%s10 + $0x24] sm:$0xf]
  %v1105 = vld [vmem:[%s10 + $0x28] sm:$0xf]
  %v1106 = vld [vmem:[%s10 + $0x2c] sm:$0xf]
  %v1107 = vld [vmem:[%s10 + $0x30] sm:$0xf]
  %v1108 = vld [vmem:[%s10 + $0x34] sm:$0xf]
  %v1109 = vld [vmem:[%s10 + $0x38] sm:$0xf]
  %v1110 = vld [vmem:[%s10 + $0x3c] sm:$0xf]
  %v1111 = vld [vmem:[%s11] sm:$0x1]
  %v1113 = vlaneseq
  %v1114 = vshrl.u32 %v1113, 7
  %v1115 = vsub.s32 0, %v1114
  %v1116 = vrot.slane %v1111, %v1115
  %v1134 = vunpack.c.l.b16 %v1095
  %v1135 = vunpack.c.l.b16 %v1096
  %v1136 = vunpack.c.l.b16 %v1097
  %v1137 = vunpack.c.l.b16 %v1098
  %v1138 = vunpack.c.l.b16 %v1099
  %v1139 = vunpack.c.l.b16 %v1100
  %v1140 = vunpack.c.l.b16 %v1101
  %v1141 = vunpack.c.l.b16 %v1102
  %v1142 = vunpack.c.l.b16 %v1103
  %v1143 = vunpack.c.l.b16 %v1104
  %v1144 = vunpack.c.l.b16 %v1105
  %v1145 = vunpack.c.l.b16 %v1106
  %v1146 = vunpack.c.l.b16 %v1107
  %v1147 = vunpack.c.l.b16 %v1108
  %v1148 = vunpack.c.l.b16 %v1109
  %v1149 = vunpack.c.l.b16 %v1110
  %v1150 = vpack.c.b16 %v1135, %v1134
  %v1151 = vpack.c.b16 %v1137, %v1136
  %v1152 = vpack.c.b16 %v1139, %v1138
  %v1153 = vpack.c.b16 %v1141, %v1140
  %v1154 = vpack.c.b16 %v1143, %v1142
  %v1155 = vpack.c.b16 %v1145, %v1144
  %v1156 = vpack.c.b16 %v1147, %v1146
  %v1157 = vpack.c.b16 %v1149, %v1148
  %1166 = vmatprep.subr.bf16.mxu0 0
  %1167 = vmatpush1.bf16.msra.mxu0 %v1150
  %1168 = vmatprep.subr.bf16.mxu0 0
  %1169 = vmatpush1.bf16.msra.mxu0 %v1151
  %1170 = vmatprep.subr.bf16.mxu0 0
  %1171 = vmatpush1.bf16.msra.mxu0 %v1152
  %1172 = vmatprep.subr.bf16.mxu0 0
  %1173 = vmatpush1.bf16.msra.mxu0 %v1153
  %1174 = vmatprep.subr.bf16.mxu0 0
  %1175 = vmatpush1.bf16.msra.mxu0 %v1154
  %1176 = vmatprep.subr.bf16.mxu0 0
  %1177 = vmatpush1.bf16.msra.mxu0 %v1155
  %1178 = vmatprep.subr.bf16.mxu0 0
  %1179 = vmatpush1.bf16.msra.mxu0 %v1156
  %1180 = vmatprep.subr.bf16.mxu0 0
  %1181 = vmatpush1.bf16.msra.mxu0 %v1157
  %1182 = vmatprep.subr.bf16.mxu0 0
  %1183 = vmatpush1.bf16.msra.mxu0 0
  %1184 = vmatprep.subr.bf16.mxu0 0
  %1185 = vmatpush1.bf16.msra.mxu0 0
  %1186 = vmatprep.subr.bf16.mxu0 0
  %1187 = vmatpush1.bf16.msra.mxu0 0
  %1188 = vmatprep.subr.bf16.mxu0 0
  %1189 = vmatpush1.bf16.msra.mxu0 0
  %1190 = vmatprep.subr.bf16.mxu0 0
  %1191 = vmatpush1.bf16.msra.mxu0 0
  %1192 = vmatprep.subr.bf16.mxu0 0
  %1193 = vmatpush1.bf16.msra.mxu0 0
  %1194 = vmatprep.subr.bf16.mxu0 0
  %1195 = vmatpush1.bf16.msra.mxu0 0
  %1196 = vmatprep.subr.bf16.mxu0 0
  %1197 = vmatpush1.bf16.msra.mxu0 0
  %1198 = vmatprep.mubr.bf16.mxu0 0
  %1199 = vmatmul.mubr.bf16.gmra.mrb[0].mxu0 %v1094
  %v1200 = vpop.f32.mrb[0].mxu0
  %v1201 = vadd.f32 %v1116, %v1200
  %v1202 = vpop.f32.mrb[0].mxu0
  %v1203 = vpop.f32.mrb[0].mxu0
  %v1204 = vpop.f32.mrb[0].mxu0
  %1205 = vdwg.mxu0
  %1206 = vst [vmem:[%s12] sm:$0xff] %v1201
  // Predicated region
  $region50: #{subgcn_forward.1} parent=0 // pred_check
    _
  $region51: #{subgcn_forward.1} parent=0 // pred_check_branch
    %1208 = sbr.rel (0) target = $region53
  $region52: #{subgcn_forward.1} parent=0 // pred_region
    _
  $region53: #{subgcn_forward.1} parent=0 // pred_fallthru
    _
  // Predicated region
  $region54: #{subgcn_forward.1} parent=0 // pred_check
    _
  $region55: #{subgcn_forward.1} parent=0 // pred_check_branch
    %1210 = sbr.rel (0) target = $region57
  $region56: #{subgcn_forward.1} parent=0 // pred_region
    _
  $region57: #{subgcn_forward.1} parent=0 // pred_fallthru
    _

</llo_original>
